<compile_context>
chip_gen: v6e
topology: v6e:2x2x1
jax: 0.10.0
libtpu: 0.0.40
codegen_flags: <defaults>
</compile_context>

<pallas_src>
import functools

import numpy as np
import jax
import jax.numpy as jnp
from jax import lax
from jax.experimental import pallas as pl
from jax.experimental.pallas import tpu as pltpu


def _round_up(x, m):
    return (x + m - 1) // m * m


# ----------------------------------------------------------------------------
# Pallas kernel: per B-tile partial sum of  dce_loss + lambda * pw_loss.
# ----------------------------------------------------------------------------
def _gcpl_kernel(feats_ref, protosT_ref, labels_ref, plab_ref, cid_row_ref,
                 cid_col_ref, out_ref, *,
                 gamma, b_const, tao, beta, lam, eps,
                 d_real, b_real, m_real, l_real, tb):
    i = pl.program_id(0)

    f = feats_ref[...]                    # [TB, Dp] f32
    pT = protosT_ref[...]                 # [Dp, Mp] f32 (prototypes transposed)
    labels = labels_ref[...]              # [TB, 1]  i32 (pad rows = -1)
    plab = plab_ref[...]                  # [1, Mp]  i32 (pad cols = -2)
    cid_row = cid_row_ref[...]            # [1, Lp]  i32 (pad cols = -3)
    cid_col = cid_col_ref[...]            # [Lp, 1]  i32 (pad rows = -3)

    mp = pT.shape[1]
    lp = cid_row.shape[1]

    # Validity masks built in-kernel (cheap VPU compares, no HBM mask traffic).
    row_valid = ((i * tb + lax.broadcasted_iota(jnp.int32, (tb, 1), 0))
                 < b_real).astype(jnp.float32)                        # [TB,1]
    proto_valid = (lax.broadcasted_iota(jnp.int32, (1, mp), 1)
                   < m_real).astype(jnp.float32)                      # [1,Mp]
    class_valid = (lax.broadcasted_iota(jnp.int32, (1, lp), 1)
                   < l_real).astype(jnp.float32)                      # [1,Lp]

    # PairwiseDistance(p=2, eps=1e-6):  d^2 = ||f - p + eps||^2
    #   = ||f||^2 + ||p||^2 - 2 f.p + 2*eps*(sum f - sum p) + D*eps^2
    fp = jnp.dot(f, pT, preferred_element_type=jnp.float32)           # [TB,Mp] (MXU)
    f2 = jnp.sum(f * f, axis=1, keepdims=True)                        # [TB,1]
    p2 = jnp.sum(pT * pT, axis=0, keepdims=True)                      # [1,Mp]
    sf = jnp.sum(f, axis=1, keepdims=True)                            # [TB,1]
    sp = jnp.sum(pT, axis=0, keepdims=True)                           # [1,Mp]
    d2 = f2 + p2 - 2.0 * fp + 2.0 * eps * (sf - sp) + d_real * eps * eps
    d2 = jnp.maximum(d2, 0.0)                                         # [TB,Mp]

    # ---- DCE loss:  -log( 1e-6 + sum_{m in label} e_m / sum_m e_m ) -----------
    same = (labels == plab).astype(jnp.float32)                       # [TB,Mp]
    e = jnp.exp(-gamma * d2) * proto_valid                            # [TB,Mp]
    denom = jnp.sum(e, axis=1, keepdims=True)                         # [TB,1]
    numer = jnp.sum(e * same, axis=1, keepdims=True)                  # [TB,1]
    safe_denom = jnp.where(denom > 0.0, denom, 1.0)
    prob = 1e-6 + jnp.where(denom > 0.0, numer / safe_denom, denom)
    dce_col = -jnp.log(prob)                                          # [TB,1]

    # ---- pairwise prototype loss (vectorized over classes) --------------------
    # dmin2[b,l] = min over prototypes of class l of d2[b,m]  (sqrt only afterwards)
    cmask = cid_col == plab                                           # [Lp,Mp] bool
    penalty = jnp.where(cmask, 0.0, 1e30).astype(jnp.float32)         # [Lp,Mp]
    d3 = jnp.broadcast_to(d2.reshape(tb, 1, mp), (tb, lp, mp))
    p3 = jnp.broadcast_to(penalty.reshape(1, lp, mp), (tb, lp, mp))
    dmin2 = jnp.min(d3 + p3, axis=-1)                                 # [TB,Lp]
    dmin2 = jnp.where(class_valid > 0.0, dmin2, 0.0)                  # kill pad classes
    dmin = jnp.sqrt(dmin2)                                            # [TB,Lp]

    sign = jnp.where(labels == cid_row, 1.0, -1.0)                    # [TB,Lp]
    z = b_const - (tao - dmin) * sign
    # stable softplus branch: clamp the exp argument (z > 10 branch returns z exactly)
    soft = jnp.log(1.0 + jnp.exp(beta * jnp.minimum(z, 10.0))) / beta
    gz = jnp.where(z > 10.0, z, soft) * class_valid                   # [TB,Lp]
    pw_col = jnp.sum(gz, axis=1, keepdims=True)                       # [TB,1]

    total_col = (dce_col + lam * pw_col) * row_valid                  # [TB,1]
    out_ref[...] = jnp.sum(total_col, axis=0, keepdims=True).reshape(1, 1, 1)


# ----------------------------------------------------------------------------
# Host-side glue: prototype assignment (dynamic data structure) + padding.
# ----------------------------------------------------------------------------
def assign_prototypes(features, labels, threshold, eps=1e-6):
    """Exact NumPy port of GCPLLoss.assign_prototype / Prototypes.update."""
    features = np.asarray(features, np.float32)
    labels = np.asarray(labels)
    protos, counts = {}, {}
    for i in range(features.shape[0]):
        f = features[i]
        lab = int(labels[i])
        if lab not in protos:
            protos[lab] = [f.copy()]
            counts[lab] = [1]
        else:
            P = np.stack(protos[lab], axis=0)
            dist = np.sqrt(np.sum((f[None, :] - P + eps) ** 2, axis=1))
            idx = int(np.argmin(dist))
            if dist[idx] < threshold:
                c = counts[lab][idx]
                protos[lab][idx] = (protos[lab][idx] * c + f) / (c + 1)
                counts[lab][idx] = c + 1
            else:
                protos[lab].append(f.copy())
                counts[lab].append(1)
    class_order = list(protos.keys())            # dict insertion order (as in torch)
    proto_mat = np.concatenate([np.stack(protos[c], axis=0) for c in class_order], 0)
    proto_lab = np.concatenate(
        [np.full(len(protos[c]), c, dtype=np.int32) for c in class_order])
    return proto_mat.astype(np.float32), proto_lab, class_order


def gcpl_loss_pallas(features, labels, proto_mat, proto_lab, class_order, *,
                     gamma=0.1, b=10.0, tao=1.0, beta=1.0, lambda_=0.1, eps=1e-6):
    features = np.asarray(features, np.float32)
    labels = np.asarray(labels, np.int32)
    proto_mat = np.asarray(proto_mat, np.float32)
    proto_lab = np.asarray(proto_lab, np.int32)
    B, D = features.shape
    M = proto_mat.shape[0]
    L = len(class_order)

    # Lane dims padded to 128 (lane-dense vregs, full MXU N); batch tiled by TB.
    Dp = _round_up(D, 128)
    Mp = _round_up(M, 128)
    Lp = _round_up(L, 128)
    TB = 8
    for cand in (256, 128, 64, 32, 16, 8):
        # keep the [TB, Lp, Mp] masked-min intermediate <= 8 MiB of VMEM
        if cand <= _round_up(B, 8) and cand * Lp * Mp * 4 <= (8 << 20):
            TB = cand
            break
    Bp = _round_up(B, TB)
    nB = Bp // TB

    feats_p = np.zeros((Bp, Dp), np.float32); feats_p[:B, :D] = features
    protosT_p = np.zeros((Dp, Mp), np.float32); protosT_p[:D, :M] = proto_mat.T
    labels_p = np.full((Bp, 1), -1, np.int32); labels_p[:B, 0] = labels
    plab_p = np.full((1, Mp), -2, np.int32); plab_p[0, :M] = proto_lab
    cid = np.asarray(class_order, np.int32)
    cid_row = np.full((1, Lp), -3, np.int32); cid_row[0, :L] = cid
    cid_col = np.full((Lp, 1), -3, np.int32); cid_col[:L, 0] = cid

    kernel = functools.partial(
        _gcpl_kernel, gamma=float(gamma), b_const=float(b), tao=float(tao),
        beta=float(beta), lam=float(lambda_), eps=float(eps),
        d_real=float(D), b_real=int(B), m_real=int(M), l_real=int(L), tb=int(TB))

    # scoped-VMEM sizing: double-buffered inputs + in-kernel intermediates + headroom
    est = 4 * (2 * (TB * Dp + Dp * Mp + 2 * TB + Mp + 2 * Lp)
               + 6 * TB * Mp + TB * Lp * Mp + 8 * TB * Lp) + (2 << 20)
    vmem_limit = int(min(max(est, 32 << 20), 64 << 20))

    out = pl.pallas_call(
        kernel,
        out_shape=jax.ShapeDtypeStruct((nB, 1, 1), jnp.float32),
        grid=(nB,),
        in_specs=[
            pl.BlockSpec((TB, Dp), lambda i: (i, 0)),   # features (tiled over B)
            pl.BlockSpec((Dp, Mp), lambda i: (0, 0)),   # prototypes^T (resident)
            pl.BlockSpec((TB, 1), lambda i: (i, 0)),    # labels   (tiled over B)
            pl.BlockSpec((1, Mp), lambda i: (0, 0)),    # prototype labels
            pl.BlockSpec((1, Lp), lambda i: (0, 0)),    # class ids (row layout)
            pl.BlockSpec((Lp, 1), lambda i: (0, 0)),    # class ids (col layout)
        ],
        out_specs=pl.BlockSpec((1, 1, 1), lambda i: (i, 0, 0)),
        compiler_params=pltpu.CompilerParams(
            dimension_semantics=("parallel",),
            vmem_limit_bytes=vmem_limit),
    )(jnp.asarray(feats_p), jnp.asarray(protosT_p), jnp.asarray(labels_p),
      jnp.asarray(plab_p), jnp.asarray(cid_row), jnp.asarray(cid_col))

    return jnp.sum(out)   # reduce per-tile partial sums -> total loss


# ----------------------------------------------------------------------------
# Pure NumPy (float64) reference of the torch forward, for verification.
# ----------------------------------------------------------------------------
def reference_loss(features, labels, proto_mat, proto_lab, class_order,
                   gamma, b, tao, beta, lam, eps=1e-6):
    features = np.asarray(features, np.float64)
    proto_mat = np.asarray(proto_mat, np.float64)
    dce, pw = 0.0, 0.0
    for i in range(features.shape[0]):
        f = features[i]
        lab = int(labels[i])
        diff = f[None, :] - proto_mat + eps
        d = np.sqrt(np.sum(diff * diff, axis=1))
        e = np.exp(-gamma * d * d)
        denom = e.sum()
        numer = e[np.asarray(proto_lab) == lab].sum()
        prob = 1e-6 + (numer / denom if denom > 0.0 else denom)
        dce += -np.log(prob)
        for cl in class_order:
            dmin = d[np.asarray(proto_lab) == cl].min()
            s = 1.0 if lab == cl else -1.0
            z = b - (tao - dmin) * s
            pw += z if z > 10.0 else np.log(1.0 + np.exp(beta * z)) / beta
    return dce + lam * pw


if __name__ == "__main__":
    key = jax.random.PRNGKey(0)
    B, D = 8, 32
    features = np.asarray(jax.random.normal(key, (B, D), dtype=jnp.float32))
    labels = np.array([0, 1, 2, 3, 0, 1, 2, 3], dtype=np.int32)

    # GCPLLoss(threshold=8.5) with default gamma/b/tao/beta/lambda_
    threshold = 8.5
    gamma, b, tao, beta, lambda_ = 0.1, 10.0, 1.0, 1.0, 0.1

    # assign_prototype (host-side, mutates the prototype dict exactly like torch)
    proto_mat, proto_lab, class_order = assign_prototypes(features, labels, threshold)

    loss = gcpl_loss_pallas(features, labels, proto_mat, proto_lab, class_order,
                            gamma=gamma, b=b, tao=tao, beta=beta, lambda_=lambda_)
    loss = jax.block_until_ready(loss)

    ref = reference_loss(features, labels, proto_mat, proto_lab, class_order,
                         gamma, b, tao, beta, lambda_)
    assert np.allclose(float(loss), ref, rtol=1e-3, atol=1e-3), (float(loss), ref)
    print("KERNEL_OK")
</pallas_src>

<mosaic_0001>
module attributes {stable_mosaic.version = 11 : i64} {
  func.func @_gcpl_kernel(%arg0: i32, %arg1: memref<8x128xf32, #tpu.memory_space<vmem>>, %arg2: memref<128x128xf32, #tpu.memory_space<vmem>>, %arg3: memref<8x1xi32, #tpu.memory_space<vmem>>, %arg4: memref<1x128xi32, #tpu.memory_space<vmem>>, %arg5: memref<1x128xi32, #tpu.memory_space<vmem>>, %arg6: memref<128x1xi32, #tpu.memory_space<vmem>>, %arg7: memref<1x1x1xf32, #tpu.memory_space<vmem>>) attributes {dimension_semantics = [#tpu.dimension_semantics<parallel>], iteration_bounds = array<i64: 1>, scalar_prefetch = 0 : i64, scratch_operands = 0 : i64, tpu.core_type = #tpu.core_type<tc>, window_params = [{transform_indices = @transform_0, window_bounds = array<i64: 8, 128>}, {pipeline_mode = #tpu.pipeline_mode<synchronous>, transform_indices = @transform_1, window_bounds = array<i64: 128, 128>}, {transform_indices = @transform_2, window_bounds = array<i64: 8, 1>}, {pipeline_mode = #tpu.pipeline_mode<synchronous>, transform_indices = @transform_3, window_bounds = array<i64: 1, 128>}, {pipeline_mode = #tpu.pipeline_mode<synchronous>, transform_indices = @transform_4, window_bounds = array<i64: 1, 128>}, {pipeline_mode = #tpu.pipeline_mode<synchronous>, transform_indices = @transform_5, window_bounds = array<i64: 128, 1>}, {transform_indices = @transform_6, window_bounds = array<i64: 1, 1, 1>}]} {
    %c0 = arith.constant 0 : index
    %c0_0 = arith.constant 0 : index
    %0 = vector.load %arg1[%c0, %c0_0] : memref<8x128xf32, #tpu.memory_space<vmem>>, vector<8x128xf32>
    %c0_1 = arith.constant 0 : index
    %c0_2 = arith.constant 0 : index
    %1 = vector.load %arg2[%c0_1, %c0_2] : memref<128x128xf32, #tpu.memory_space<vmem>>, vector<128x128xf32>
    %c0_3 = arith.constant 0 : index
    %c0_4 = arith.constant 0 : index
    %2 = vector.load %arg3[%c0_3, %c0_4] : memref<8x1xi32, #tpu.memory_space<vmem>>, vector<8x1xi32>
    %c0_5 = arith.constant 0 : index
    %c0_6 = arith.constant 0 : index
    %3 = vector.load %arg4[%c0_5, %c0_6] : memref<1x128xi32, #tpu.memory_space<vmem>>, vector<1x128xi32>
    %c0_7 = arith.constant 0 : index
    %c0_8 = arith.constant 0 : index
    %4 = vector.load %arg5[%c0_7, %c0_8] : memref<1x128xi32, #tpu.memory_space<vmem>>, vector<1x128xi32>
    %c0_9 = arith.constant 0 : index
    %c0_10 = arith.constant 0 : index
    %5 = vector.load %arg6[%c0_9, %c0_10] : memref<128x1xi32, #tpu.memory_space<vmem>>, vector<128x1xi32>
    %c8_i32 = arith.constant 8 : i32
    %6 = arith.muli %arg0, %c8_i32 : i32
    %7 = tpu.iota {dimensions = array<i32: 0>} : vector<8x1xi32>
    %8 = vector.broadcast %6 : i32 to vector<8x1xi32>
    %9 = arith.addi %8, %7 : vector<8x1xi32>
    %c8_i32_11 = arith.constant 8 : i32
    %10 = vector.broadcast %c8_i32_11 : i32 to vector<8x1xi32>
    %11 = arith.cmpi slt, %9, %10 : vector<8x1xi32>
    %12 = arith.extui %11 : vector<8x1xi1> to vector<8x1xi32>
    %13 = arith.sitofp %12 : vector<8x1xi32> to vector<8x1xf32>
    %14 = tpu.iota {dimensions = array<i32: 1>} : vector<1x128xi32>
    %c4_i32 = arith.constant 4 : i32
    %15 = vector.broadcast %c4_i32 : i32 to vector<1x128xi32>
    %16 = arith.cmpi slt, %14, %15 : vector<1x128xi32>
    %17 = arith.extui %16 : vector<1x128xi1> to vector<1x128xi32>
    %18 = arith.sitofp %17 : vector<1x128xi32> to vector<1x128xf32>
    %19 = tpu.iota {dimensions = array<i32: 1>} : vector<1x128xi32>
    %c4_i32_12 = arith.constant 4 : i32
    %20 = vector.broadcast %c4_i32_12 : i32 to vector<1x128xi32>
    %21 = arith.cmpi slt, %19, %20 : vector<1x128xi32>
    %22 = arith.extui %21 : vector<1x128xi1> to vector<1x128xi32>
    %23 = arith.sitofp %22 : vector<1x128xi32> to vector<1x128xf32>
    %cst = arith.constant dense<0.000000e+00> : vector<8x128xf32>
    %24 = tpu.matmul %0, %1, %cst {dimension_numbers = #tpu.dot_dimension_numbers<[1], [0], [0], [1], [0, 0, 1, 1], [], []>} : vector<8x128xf32>, vector<128x128xf32>, vector<8x128xf32> -> vector<8x128xf32>
    %25 = arith.mulf %0, %0 : vector<8x128xf32>
    %cst_13 = arith.constant dense<0.000000e+00> : vector<8xf32>
    %26 = vector.multi_reduction <add>, %25, %cst_13 [1] : vector<8x128xf32> to vector<8xf32>
    %27 = vector.shape_cast %26 : vector<8xf32> to vector<8x1xf32>
    %28 = arith.mulf %1, %1 : vector<128x128xf32>
    %cst_14 = arith.constant dense<0.000000e+00> : vector<128xf32>
    %29 = vector.multi_reduction <add>, %28, %cst_14 [0] : vector<128x128xf32> to vector<128xf32>
    %30 = vector.shape_cast %29 : vector<128xf32> to vector<1x128xf32>
    %cst_15 = arith.constant dense<0.000000e+00> : vector<8xf32>
    %31 = vector.multi_reduction <add>, %0, %cst_15 [1] : vector<8x128xf32> to vector<8xf32>
    %32 = vector.shape_cast %31 : vector<8xf32> to vector<8x1xf32>
    %cst_16 = arith.constant dense<0.000000e+00> : vector<128xf32>
    %33 = vector.multi_reduction <add>, %1, %cst_16 [0] : vector<128x128xf32> to vector<128xf32>
    %34 = vector.shape_cast %33 : vector<128xf32> to vector<1x128xf32>
    %35 = vector.broadcast %27 : vector<8x1xf32> to vector<8x128xf32>
    %36 = vector.broadcast %30 : vector<1x128xf32> to vector<8x128xf32>
    %37 = arith.addf %35, %36 : vector<8x128xf32>
    %cst_17 = arith.constant 2.000000e+00 : f32
    %38 = vector.broadcast %cst_17 : f32 to vector<8x128xf32>
    %39 = arith.mulf %38, %24 : vector<8x128xf32>
    %40 = arith.subf %37, %39 : vector<8x128xf32>
    %41 = vector.broadcast %32 : vector<8x1xf32> to vector<8x128xf32>
    %42 = vector.broadcast %34 : vector<1x128xf32> to vector<8x128xf32>
    %43 = arith.subf %41, %42 : vector<8x128xf32>
    %cst_18 = arith.constant 2.000000e-06 : f32
    %44 = vector.broadcast %cst_18 : f32 to vector<8x128xf32>
    %45 = arith.mulf %44, %43 : vector<8x128xf32>
    %46 = arith.addf %40, %45 : vector<8x128xf32>
    %cst_19 = arith.constant 3.200000e-11 : f32
    %47 = vector.broadcast %cst_19 : f32 to vector<8x128xf32>
    %48 = arith.addf %46, %47 : vector<8x128xf32>
    %cst_20 = arith.constant 0.000000e+00 : f32
    %49 = vector.broadcast %cst_20 : f32 to vector<8x128xf32>
    %50 = arith.maximumf %48, %49 : vector<8x128xf32>
    %51 = vector.broadcast %2 : vector<8x1xi32> to vector<8x128xi32>
    %52 = vector.broadcast %3 : vector<1x128xi32> to vector<8x128xi32>
    %53 = arith.cmpi eq, %51, %52 : vector<8x128xi32>
    %54 = arith.extui %53 : vector<8x128xi1> to vector<8x128xi32>
    %55 = arith.sitofp %54 : vector<8x128xi32> to vector<8x128xf32>
    %cst_21 = arith.constant -1.000000e-01 : f32
    %56 = vector.broadcast %cst_21 : f32 to vector<8x128xf32>
    %57 = arith.mulf %56, %50 : vector<8x128xf32>
    %58 = math.exp %57 : vector<8x128xf32>
    %59 = vector.broadcast %18 : vector<1x128xf32> to vector<8x128xf32>
    %60 = arith.mulf %58, %59 : vector<8x128xf32>
    %cst_22 = arith.constant dense<0.000000e+00> : vector<8xf32>
    %61 = vector.multi_reduction <add>, %60, %cst_22 [1] : vector<8x128xf32> to vector<8xf32>
    %62 = vector.shape_cast %61 : vector<8xf32> to vector<8x1xf32>
    %63 = arith.mulf %60, %55 : vector<8x128xf32>
    %cst_23 = arith.constant dense<0.000000e+00> : vector<8xf32>
    %64 = vector.multi_reduction <add>, %63, %cst_23 [1] : vector<8x128xf32> to vector<8xf32>
    %65 = vector.shape_cast %64 : vector<8xf32> to vector<8x1xf32>
    %cst_24 = arith.constant 0.000000e+00 : f32
    %66 = vector.broadcast %cst_24 : f32 to vector<8x1xf32>
    %67 = arith.cmpf ogt, %62, %66 : vector<8x1xf32>
    %cst_25 = arith.constant 1.000000e+00 : f32
    %68 = vector.broadcast %cst_25 : f32 to vector<8x1xf32>
    %69 = arith.select %67, %62, %68 : vector<8x1xi1>, vector<8x1xf32>
    %cst_26 = arith.constant 0.000000e+00 : f32
    %70 = vector.broadcast %cst_26 : f32 to vector<8x1xf32>
    %71 = arith.cmpf ogt, %62, %70 : vector<8x1xf32>
    %72 = arith.divf %65, %69 : vector<8x1xf32>
    %73 = arith.select %71, %72, %62 : vector<8x1xi1>, vector<8x1xf32>
    %cst_27 = arith.constant 9.99999997E-7 : f32
    %74 = vector.broadcast %cst_27 : f32 to vector<8x1xf32>
    %75 = arith.addf %74, %73 : vector<8x1xf32>
    %76 = math.log %75 : vector<8x1xf32>
    %cst_28 = arith.constant 0.000000e+00 : f32
    %77 = vector.broadcast %cst_28 : f32 to vector<8x1xf32>
    %78 = arith.subf %77, %76 : vector<8x1xf32>
    %79 = vector.broadcast %5 : vector<128x1xi32> to vector<128x128xi32>
    %80 = vector.broadcast %3 : vector<1x128xi32> to vector<128x128xi32>
    %81 = arith.cmpi eq, %79, %80 : vector<128x128xi32>
    %cst_29 = arith.constant 0.000000e+00 : f32
    %cst_30 = arith.constant 1.000000e+30 : f32
    %82 = vector.broadcast %cst_29 : f32 to vector<128x128xf32>
    %83 = vector.broadcast %cst_30 : f32 to vector<128x128xf32>
    %84 = arith.select %81, %82, %83 : vector<128x128xi1>, vector<128x128xf32>
    %85 = vector.shape_cast %50 : vector<8x128xf32> to vector<8x1x128xf32>
    %86 = vector.shape_cast %85 : vector<8x1x128xf32> to vector<8x1x128xf32>
    %87 = vector.broadcast %86 : vector<8x1x128xf32> to vector<8x128x128xf32>
    %88 = vector.shape_cast %84 : vector<128x128xf32> to vector<1x128x128xf32>
    %89 = vector.shape_cast %88 : vector<1x128x128xf32> to vector<1x128x128xf32>
    %90 = vector.broadcast %89 : vector<1x128x128xf32> to vector<8x128x128xf32>
    %91 = arith.addf %87, %90 : vector<8x128x128xf32>
    %cst_31 = arith.constant dense<0x7F800000> : vector<8x128xf32>
    %92 = vector.multi_reduction <minimumf>, %91, %cst_31 [2] : vector<8x128x128xf32> to vector<8x128xf32>
    %cst_32 = arith.constant 0.000000e+00 : f32
    %93 = vector.broadcast %cst_32 : f32 to vector<1x128xf32>
    %94 = arith.cmpf ogt, %23, %93 : vector<1x128xf32>
    %cst_33 = arith.constant 0.000000e+00 : f32
    %95 = vector.shape_cast %94 : vector<1x128xi1> to vector<1x128xi1>
    %96 = vector.broadcast %95 : vector<1x128xi1> to vector<8x128xi1>
    %97 = vector.broadcast %cst_33 : f32 to vector<8x128xf32>
    %98 = arith.select %96, %92, %97 : vector<8x128xi1>, vector<8x128xf32>
    %99 = math.sqrt %98 : vector<8x128xf32>
    %100 = vector.broadcast %2 : vector<8x1xi32> to vector<8x128xi32>
    %101 = vector.broadcast %4 : vector<1x128xi32> to vector<8x128xi32>
    %102 = arith.cmpi eq, %100, %101 : vector<8x128xi32>
    %cst_34 = arith.constant 1.000000e+00 : f32
    %cst_35 = arith.constant -1.000000e+00 : f32
    %103 = vector.broadcast %cst_34 : f32 to vector<8x128xf32>
    %104 = vector.broadcast %cst_35 : f32 to vector<8x128xf32>
    %105 = arith.select %102, %103, %104 : vector<8x128xi1>, vector<8x128xf32>
    %cst_36 = arith.constant 1.000000e+00 : f32
    %106 = vector.broadcast %cst_36 : f32 to vector<8x128xf32>
    %107 = arith.subf %106, %99 : vector<8x128xf32>
    %108 = arith.mulf %107, %105 : vector<8x128xf32>
    %cst_37 = arith.constant 1.000000e+01 : f32
    %109 = vector.broadcast %cst_37 : f32 to vector<8x128xf32>
    %110 = arith.subf %109, %108 : vector<8x128xf32>
    %cst_38 = arith.constant 1.000000e+01 : f32
    %111 = vector.broadcast %cst_38 : f32 to vector<8x128xf32>
    %112 = arith.minimumf %110, %111 : vector<8x128xf32>
    %cst_39 = arith.constant 1.000000e+00 : f32
    %113 = vector.broadcast %cst_39 : f32 to vector<8x128xf32>
    %114 = arith.mulf %113, %112 : vector<8x128xf32>
    %115 = math.exp %114 : vector<8x128xf32>
    %cst_40 = arith.constant 1.000000e+00 : f32
    %116 = vector.broadcast %cst_40 : f32 to vector<8x128xf32>
    %117 = arith.addf %116, %115 : vector<8x128xf32>
    %118 = math.log %117 : vector<8x128xf32>
    %cst_41 = arith.constant 1.000000e+00 : f32
    %119 = vector.broadcast %cst_41 : f32 to vector<8x128xf32>
    %120 = arith.divf %118, %119 : vector<8x128xf32>
    %cst_42 = arith.constant 1.000000e+01 : f32
    %121 = vector.broadcast %cst_42 : f32 to vector<8x128xf32>
    %122 = arith.cmpf ogt, %110, %121 : vector<8x128xf32>
    %123 = arith.select %122, %110, %120 : vector<8x128xi1>, vector<8x128xf32>
    %124 = vector.broadcast %23 : vector<1x128xf32> to vector<8x128xf32>
    %125 = arith.mulf %123, %124 : vector<8x128xf32>
    %cst_43 = arith.constant dense<0.000000e+00> : vector<8xf32>
    %126 = vector.multi_reduction <add>, %125, %cst_43 [1] : vector<8x128xf32> to vector<8xf32>
    %127 = vector.shape_cast %126 : vector<8xf32> to vector<8x1xf32>
    %cst_44 = arith.constant 1.000000e-01 : f32
    %128 = vector.broadcast %cst_44 : f32 to vector<8x1xf32>
    %129 = arith.mulf %128, %127 : vector<8x1xf32>
    %130 = arith.addf %78, %129 : vector<8x1xf32>
    %131 = arith.mulf %130, %13 : vector<8x1xf32>
    %cst_45 = arith.constant dense<0.000000e+00> : vector<1xf32>
    %132 = vector.multi_reduction <add>, %131, %cst_45 [0] : vector<8x1xf32> to vector<1xf32>
    %133 = vector.shape_cast %132 : vector<1xf32> to vector<1x1xf32>
    %134 = vector.shape_cast %133 : vector<1x1xf32> to vector<1x1x1xf32>
    %c0_46 = arith.constant 0 : index
    %c0_47 = arith.constant 0 : index
    %c0_48 = arith.constant 0 : index
    %135 = vector.load %arg7[%c0_46, %c0_47, %c0_48] : memref<1x1x1xf32, #tpu.memory_space<vmem>>, vector<1x1x1xf32>
    tpu.vector_store %arg7[%c0_46, %c0_47, %c0_48], %134 {strides = array<i32>} : memref<1x1x1xf32, #tpu.memory_space<vmem>>, vector<1x1x1xf32>,
    return
  }
  func.func @transform_0(%arg0: i32) -> (i32, i32) {
    %c0_i32 = arith.constant 0 : i32
    %c0_i32_0 = arith.constant 0 : i32
    return %arg0, %c0_i32 : i32, i32
  }
  func.func @transform_1(%arg0: i32) -> (i32, i32) {
    %c0_i32 = arith.constant 0 : i32
    %c0_i32_0 = arith.constant 0 : i32
    %c0_i32_1 = arith.constant 0 : i32
    return %c0_i32, %c0_i32_0 : i32, i32
  }
  func.func @transform_2(%arg0: i32) -> (i32, i32) {
    %c0_i32 = arith.constant 0 : i32
    %c0_i32_0 = arith.constant 0 : i32
    return %arg0, %c0_i32 : i32, i32
  }
  func.func @transform_3(%arg0: i32) -> (i32, i32) {
    %c0_i32 = arith.constant 0 : i32
    %c0_i32_0 = arith.constant 0 : i32
    %c0_i32_1 = arith.constant 0 : i32
    return %c0_i32, %c0_i32_0 : i32, i32
  }
  func.func @transform_4(%arg0: i32) -> (i32, i32) {
    %c0_i32 = arith.constant 0 : i32
    %c0_i32_0 = arith.constant 0 : i32
    %c0_i32_1 = arith.constant 0 : i32
    return %c0_i32, %c0_i32_0 : i32, i32
  }
  func.func @transform_5(%arg0: i32) -> (i32, i32) {
    %c0_i32 = arith.constant 0 : i32
    %c0_i32_0 = arith.constant 0 : i32
    %c0_i32_1 = arith.constant 0 : i32
    return %c0_i32, %c0_i32_0 : i32, i32
  }
  func.func @transform_6(%arg0: i32) -> (i32, i32, i32) {
    %c0_i32 = arith.constant 0 : i32
    %c0_i32_0 = arith.constant 0 : i32
    %c0_i32_1 = arith.constant 0 : i32
    return %arg0, %c0_i32, %c0_i32_0 : i32, i32, i32
  }
}

</mosaic_0001>

<llo_original>
// kernel: tpu_custom_call.1
$region0: #{tpu_custom_call.1}
  #allocation0 [shape = 'u32[]', space=smem, size = 0x4, offset = 0x4, fixed_abs, tag = 'smem constant byte address 0x4 - core index']
  #allocation1 [shape = 'u32[144,128]{1,0:T(1,128)}', space=vmem, size = 0x12000, scoped, tag = 'internal scratch']
  %s0 = inlined_call_operand.vmem [shape: f32[8,128], index: 0, kind: input, shape index: {}]
  %s1 = inlined_call_operand.vmem [shape: f32[128,128], index: 1, kind: input, shape index: {}]
  %s2 = inlined_call_operand.vmem [shape: s32[8,1], index: 2, kind: input, shape index: {}]
  %s3 = inlined_call_operand.vmem [shape: s32[1,128], index: 3, kind: input, shape index: {}]
  %s4 = inlined_call_operand.vmem [shape: s32[1,128], index: 4, kind: input, shape index: {}]
  %s5 = inlined_call_operand.vmem [shape: s32[128,1], index: 5, kind: input, shape index: {}]
  %s6 = inlined_call_operand.hbm [shape: f32[1,1,1], index: 6, kind: output, shape index: {}]
  %s7 = sld [smem:[#allocation0]]
  $region34: #{tpu_custom_call.1} parent=0
    _
  %s9 = ssub.s32 1, %s7
  %s10 = scalar_select 0, %s9, %s7
  $region1: #{tpu_custom_call.1} parent=0
    #allocation2 [shape = 'u8[512]{0}', space=vmem, size = 0x400, scoped, tag = 'output window, operand 0, single buffered']
    #allocation3 [shape = 's32[1]{0}', space=sflag, size = 0x4, scoped, tag = 'scoped memory for tpu_custom_call.1']
    %11 = vsyncpa [#allocation3], 0
    // Predicated region
    $region2: #{tpu_custom_call.1} parent=1 // pred_check
      _
    $region3: #{tpu_custom_call.1} parent=1 // pred_check_branch
      %13 = sbr.rel (0) target = $region5
    $region4: #{tpu_custom_call.1} parent=1 // pred_region
      _
    $region5: #{tpu_custom_call.1} parent=1 // pred_fallthru
      _
    // Predicated region
    $region6: #{tpu_custom_call.1} parent=1 // pred_check
      _
    $region7: #{tpu_custom_call.1} parent=1 // pred_check_branch
      %15 = sbr.rel (0) target = $region9
    $region8: #{tpu_custom_call.1} parent=1 // pred_region
      _
    $region9: #{tpu_custom_call.1} parent=1 // pred_fallthru
      _
    // Predicated region
    $region10: #{tpu_custom_call.1} parent=1 // pred_check
      _
    $region11: #{tpu_custom_call.1} parent=1 // pred_check_branch
      %17 = sbr.rel (0) target = $region13
    $region12: #{tpu_custom_call.1} parent=1 // pred_region
      _
    $region13: #{tpu_custom_call.1} parent=1 // pred_fallthru
      _
    // Predicated region
    $region14: #{tpu_custom_call.1} parent=1 // pred_check
      _
    $region15: #{tpu_custom_call.1} parent=1 // pred_check_branch
      %19 = sbr.rel (0) target = $region17
    $region16: #{tpu_custom_call.1} parent=1 // pred_region
      _
    $region17: #{tpu_custom_call.1} parent=1 // pred_fallthru
      _
    // Predicated region
    $region18: #{tpu_custom_call.1} parent=1 // pred_check
      _
    $region19: #{tpu_custom_call.1} parent=1 // pred_check_branch
      %21 = sbr.rel (0) target = $region21
    $region20: #{tpu_custom_call.1} parent=1 // pred_region
      _
    $region21: #{tpu_custom_call.1} parent=1 // pred_fallthru
      _
    // Predicated region
    $region22: #{tpu_custom_call.1} parent=1 // pred_check
      _
    $region23: #{tpu_custom_call.1} parent=1 // pred_check_branch
      %23 = sbr.rel (0) target = $region25
    $region24: #{tpu_custom_call.1} parent=1 // pred_region
      _
    $region25: #{tpu_custom_call.1} parent=1 // pred_fallthru
      _
    %v24 = vld [vmem:[%s0] sm:$0xff]
    %v25 = vld [vmem:[%s1] sm:$0xff]
    %v26 = vld [vmem:[%s1 + $0x8] sm:$0xff]
    %v27 = vld [vmem:[%s1 + $0x10] sm:$0xff]
    %v28 = vld [vmem:[%s1 + $0x18] sm:$0xff]
    %v29 = vld [vmem:[%s1 + $0x20] sm:$0xff]
    %v30 = vld [vmem:[%s1 + $0x28] sm:$0xff]
    %v31 = vld [vmem:[%s1 + $0x30] sm:$0xff]
    %v32 = vld [vmem:[%s1 + $0x38] sm:$0xff]
    %v33 = vld [vmem:[%s1 + $0x40] sm:$0xff]
    %v34 = vld [vmem:[%s1 + $0x48] sm:$0xff]
    %v35 = vld [vmem:[%s1 + $0x50] sm:$0xff]
    %v36 = vld [vmem:[%s1 + $0x58] sm:$0xff]
    %v37 = vld [vmem:[%s1 + $0x60] sm:$0xff]
    %v38 = vld [vmem:[%s1 + $0x68] sm:$0xff]
    %v39 = vld [vmem:[%s1 + $0x70] sm:$0xff]
    %v40 = vld [vmem:[%s1 + $0x78] sm:$0xff]
    %v41 = vld [vmem:[%s2] sm:$0xff]
    %v42 = vld [vmem:[%s3] sm:$0x1]
    %v43 = vld [vmem:[%s4] sm:$0x1]
    %v44 = vld [vmem:[%s5] sm:$0xff]
    %v45 = vld [vmem:[%s5 + $0x8] sm:$0xff]
    %v46 = vld [vmem:[%s5 + $0x10] sm:$0xff]
    %v47 = vld [vmem:[%s5 + $0x18] sm:$0xff]
    %v48 = vld [vmem:[%s5 + $0x20] sm:$0xff]
    %v49 = vld [vmem:[%s5 + $0x28] sm:$0xff]
    %v50 = vld [vmem:[%s5 + $0x30] sm:$0xff]
    %v51 = vld [vmem:[%s5 + $0x38] sm:$0xff]
    %v52 = vld [vmem:[%s5 + $0x40] sm:$0xff]
    %v53 = vld [vmem:[%s5 + $0x48] sm:$0xff]
    %v54 = vld [vmem:[%s5 + $0x50] sm:$0xff]
    %v55 = vld [vmem:[%s5 + $0x58] sm:$0xff]
    %v56 = vld [vmem:[%s5 + $0x60] sm:$0xff]
    %v57 = vld [vmem:[%s5 + $0x68] sm:$0xff]
    %v58 = vld [vmem:[%s5 + $0x70] sm:$0xff]
    %v59 = vld [vmem:[%s5 + $0x78] sm:$0xff]
    %s60 = smul.u32 0, 8
    %v61 = vlaneseq
    %v62 = vshrl.u32 %v61, 7
    %v63 = vstv %s60
    %v64 = vadd.s32 %v63, %v62
    %vm65 = vcmp.lt.s32.totalorder %v64, 8
    %v66 = vsel %vm65, 1, 0
    %v67 = vcvt.s32.f32 %v66
    %v68 = vlaneseq
    %v69 = vand.u32 %v68, 127
    %vm70 = vcmp.lt.s32.totalorder %v69, 4
    %v71 = vsel %vm70, 1, 0
    %v72 = vcvt.s32.f32 %v71
    %73 = vmatprep.subr.mxu0 0.0
    %74 = vmatpush1.msra.mxu0 %v40
    %75 = vmatprep.subr.mxu0 0.0
    %76 = vmatpush1.msra.mxu0 %v39
    %77 = vmatprep.subr.mxu0 0.0
    %78 = vmatpush1.msra.mxu0 %v38
    %79 = vmatprep.subr.mxu0 0.0
    %80 = vmatpush1.msra.mxu0 %v37
    %81 = vmatprep.subr.mxu0 0.0
    %82 = vmatpush1.msra.mxu0 %v36
    %83 = vmatprep.subr.mxu0 0.0
    %84 = vmatpush1.msra.mxu0 %v35
    %85 = vmatprep.subr.mxu0 0.0
    %86 = vmatpush1.msra.mxu0 %v34
    %87 = vmatprep.subr.mxu0 0.0
    %88 = vmatpush1.msra.mxu0 %v33
    %89 = vmatprep.subr.mxu0 0.0
    %90 = vmatpush1.msra.mxu0 %v32
    %91 = vmatprep.subr.mxu0 0.0
    %92 = vmatpush1.msra.mxu0 %v31
    %93 = vmatprep.subr.mxu0 0.0
    %94 = vmatpush1.msra.mxu0 %v30
    %95 = vmatprep.subr.mxu0 0.0
    %96 = vmatpush1.msra.mxu0 %v29
    %97 = vmatprep.subr.mxu0 0.0
    %98 = vmatpush1.msra.mxu0 %v28
    %99 = vmatprep.subr.mxu0 0.0
    %100 = vmatpush1.msra.mxu0 %v27
    %101 = vmatprep.subr.mxu0 0.0
    %102 = vmatpush1.msra.mxu0 %v26
    %103 = vmatprep.subr.mxu0 0.0
    %104 = vmatpush1.msra.mxu0 %v25
    %105 = vmatprep.subr.mxu0 0.0
    %106 = vmatpush2.msra.mxu0 0.0
    %107 = vmatprep.subr.mxu0 0.0
    %108 = vmatpush2.msra.mxu0 0.0
    %109 = vmatprep.subr.mxu0 0.0
    %110 = vmatpush2.msra.mxu0 0.0
    %111 = vmatprep.subr.mxu0 0.0
    %112 = vmatpush2.msra.mxu0 0.0
    %113 = vmatprep.subr.mxu0 0.0
    %114 = vmatpush2.msra.mxu0 0.0
    %115 = vmatprep.subr.mxu0 0.0
    %116 = vmatpush2.msra.mxu0 0.0
    %117 = vmatprep.subr.mxu0 0.0
    %118 = vmatpush2.msra.mxu0 0.0
    %119 = vmatprep.subr.mxu0 0.0
    %120 = vmatpush2.msra.mxu0 0.0
    %121 = vmatprep.subr.mxu0 0.0
    %122 = vmatpush2.msra.mxu0 0.0
    %123 = vmatprep.subr.mxu0 0.0
    %124 = vmatpush2.msra.mxu0 0.0
    %125 = vmatprep.subr.mxu0 0.0
    %126 = vmatpush2.msra.mxu0 0.0
    %127 = vmatprep.subr.mxu0 0.0
    %128 = vmatpush2.msra.mxu0 0.0
    %129 = vmatprep.subr.mxu0 0.0
    %130 = vmatpush2.msra.mxu0 0.0
    %131 = vmatprep.subr.mxu0 0.0
    %132 = vmatpush2.msra.mxu0 0.0
    %133 = vmatprep.subr.mxu0 0.0
    %134 = vmatpush2.msra.mxu0 0.0
    %135 = vmatprep.subr.mxu0 0.0
    %136 = vmatpush2.msra.mxu0 0.0
    %137 = vmatprep.mubr.f32.mxu0 0.0
    %138 = vmatmul.mubr.f32.gmra.mxu0 %v24
    %v139 = vpop.f32.mrf.mxu0
    %v140 = vadd.f32 0.0, %v139
    %v141 = vpop.f32.mrf.mxu0
    %142 = vdwg.mxu0
    %v143 = vmul.f32 %v24, %v24
    %144 = vadd.xlane.f32.xlu0 %v143
    %v145 = vpop.xlane.xlu0 %144
    %v146 = vmul.f32 %v25, %v25
    %v147 = vmul.f32 %v26, %v26
    %v148 = vmul.f32 %v27, %v27
    %v149 = vmul.f32 %v28, %v28
    %v150 = vmul.f32 %v29, %v29
    %v151 = vmul.f32 %v30, %v30
    %v152 = vmul.f32 %v31, %v31
    %v153 = vmul.f32 %v32, %v32
    %v154 = vmul.f32 %v33, %v33
    %v155 = vmul.f32 %v34, %v34
    %v156 = vmul.f32 %v35, %v35
    %v157 = vmul.f32 %v36, %v36
    %v158 = vmul.f32 %v37, %v37
    %v159 = vmul.f32 %v38, %v38
    %v160 = vmul.f32 %v39, %v39
    %v161 = vmul.f32 %v40, %v40
    %v162 = vadd.f32 %v146, %v147
    %v163 = vadd.f32 %v162, %v148
    %v164 = vadd.f32 %v163, %v149
    %v165 = vadd.f32 %v164, %v150
    %v166 = vadd.f32 %v165, %v151
    %v167 = vadd.f32 %v166, %v152
    %v168 = vadd.f32 %v167, %v153
    %v169 = vadd.f32 %v168, %v154
    %v170 = vadd.f32 %v169, %v155
    %v171 = vadd.f32 %v170, %v156
    %v172 = vadd.f32 %v171, %v157
    %v173 = vadd.f32 %v172, %v158
    %v174 = vadd.f32 %v173, %v159
    %v175 = vadd.f32 %v174, %v160
    %v176 = vadd.f32 %v175, %v161
    %v177 = vrot.slane %v176, 4
    %v178 = vadd.f32 %v176, %v177
    %v179 = vrot.slane %v178, 2
    %v180 = vadd.f32 %v178, %v179
    %v181 = vrot.slane %v180, 1
    %v182 = vadd.f32 %v180, %v181
    %183 = vadd.xlane.f32.xlu0 %v24
    %v184 = vpop.xlane.xlu0 %183
    %v185 = vadd.f32 %v25, %v26
    %v186 = vadd.f32 %v185, %v27
    %v187 = vadd.f32 %v186, %v28
    %v188 = vadd.f32 %v187, %v29
    %v189 = vadd.f32 %v188, %v30
    %v190 = vadd.f32 %v189, %v31
    %v191 = vadd.f32 %v190, %v32
    %v192 = vadd.f32 %v191, %v33
    %v193 = vadd.f32 %v192, %v34
    %v194 = vadd.f32 %v193, %v35
    %v195 = vadd.f32 %v194, %v36
    %v196 = vadd.f32 %v195, %v37
    %v197 = vadd.f32 %v196, %v38
    %v198 = vadd.f32 %v197, %v39
    %v199 = vadd.f32 %v198, %v40
    %v200 = vrot.slane %v199, 4
    %v201 = vadd.f32 %v199, %v200
    %v202 = vrot.slane %v201, 2
    %v203 = vadd.f32 %v201, %v202
    %v204 = vrot.slane %v203, 1
    %v205 = vadd.f32 %v203, %v204
    %v206 = vadd.f32 %v145, %v182
    %v207 = vmul.f32 %v140, 2.0
    %v208 = vsub.f32 %v206, %v207
    %v209 = vsub.f32 %v184, %v205
    %v210 = vmul.f32 %v209, 2e-06
    %v211 = vadd.f32 %v208, %v210
    %v212 = vadd.f32 %v211, 3.2e-11
    %v213 = vmax.f32 %v212, 0.0
    %214 = vset.pattern.permute.xlu0 0
    %215 = vperm.xlu0 %214, %v41
    %v216 = vpop.permute.xlu0 %215
    %v217 = vlaneseq
    %v218 = vshrl.u32 %v217, 7
    %v219 = vsub.s32 0, %v218
    %v220 = vrot.slane %v42, %v219
    %vm221 = vcmp.eq.s32.totalorder %v216, %v220
    %v222 = vsel %vm221, 1, 0
    %v223 = vcvt.s32.f32 %v222
    %v224 = vmul.f32 %v213, -0.1
    %v225 = vmul.f32 %v224, 1.442695
    %v226 = vpow.pop %v225
    %v227 = vmul.f32 %v226, %v72
    %228 = vadd.xlane.f32.xlu0 %v227
    %v229 = vpop.xlane.xlu0 %228
    %v230 = vmul.f32 %v227, %v223
    %231 = vadd.xlane.f32.xlu0 %v230
    %v232 = vpop.xlane.xlu0 %231
    %vm233 = vcmp.gt.f32.partialorder %v229, 0.0
    %v234 = vsel %vm233, %v229, 1.0
    %v235 = vrcp.pop %v234
    %v236 = vmul.f32 %v232, %v235
    %v237 = vsel %vm233, %v236, %v229
    %v238 = vadd.f32 %v237, 1e-06
    %v239 = vlog2.pop %v238
    %v240 = vmul.f32 %v239, 0.6931472
    %v241 = vsub.f32 0.0, %v240
    %242 = vset.pattern.permute.xlu0 0
    %243 = vperm.xlu0 %242, %v44
    %v244 = vpop.permute.xlu0 %243
    %245 = vset.pattern.permute.xlu0 0
    %246 = vperm.xlu0 %245, %v45
    %v247 = vpop.permute.xlu0 %246
    %248 = vset.pattern.permute.xlu0 0
    %249 = vperm.xlu0 %248, %v46
    %v250 = vpop.permute.xlu0 %249
    %251 = vset.pattern.permute.xlu0 0
    %252 = vperm.xlu0 %251, %v47
    %v253 = vpop.permute.xlu0 %252
    %254 = vset.pattern.permute.xlu0 0
    %255 = vperm.xlu0 %254, %v48
    %v256 = vpop.permute.xlu0 %255
    %257 = vset.pattern.permute.xlu0 0
    %258 = vperm.xlu0 %257, %v49
    %v259 = vpop.permute.xlu0 %258
    %260 = vset.pattern.permute.xlu0 0
    %261 = vperm.xlu0 %260, %v50
    %v262 = vpop.permute.xlu0 %261
    %263 = vset.pattern.permute.xlu0 0
    %264 = vperm.xlu0 %263, %v51
    %v265 = vpop.permute.xlu0 %264
    %266 = vset.pattern.permute.xlu0 0
    %267 = vperm.xlu0 %266, %v52
    %v268 = vpop.permute.xlu0 %267
    %269 = vset.pattern.permute.xlu0 0
    %270 = vperm.xlu0 %269, %v53
    %v271 = vpop.permute.xlu0 %270
    %272 = vset.pattern.permute.xlu0 0
    %273 = vperm.xlu0 %272, %v54
    %v274 = vpop.permute.xlu0 %273
    %275 = vset.pattern.permute.xlu0 0
    %276 = vperm.xlu0 %275, %v55
    %v277 = vpop.permute.xlu0 %276
    %278 = vset.pattern.permute.xlu0 0
    %279 = vperm.xlu0 %278, %v56
    %v280 = vpop.permute.xlu0 %279
    %281 = vset.pattern.permute.xlu0 0
    %282 = vperm.xlu0 %281, %v57
    %v283 = vpop.permute.xlu0 %282
    %284 = vset.pattern.permute.xlu0 0
    %285 = vperm.xlu0 %284, %v58
    %v286 = vpop.permute.xlu0 %285
    %287 = vset.pattern.permute.xlu0 0
    %288 = vperm.xlu0 %287, %v59
    %v289 = vpop.permute.xlu0 %288
    %vm290 = vcmp.eq.s32.totalorder %v244, %v220
    %vm291 = vcmp.eq.s32.totalorder %v247, %v220
    %vm292 = vcmp.eq.s32.totalorder %v250, %v220
    %vm293 = vcmp.eq.s32.totalorder %v253, %v220
    %vm294 = vcmp.eq.s32.totalorder %v256, %v220
    %vm295 = vcmp.eq.s32.totalorder %v259, %v220
    %vm296 = vcmp.eq.s32.totalorder %v262, %v220
    %vm297 = vcmp.eq.s32.totalorder %v265, %v220
    %vm298 = vcmp.eq.s32.totalorder %v268, %v220
    %vm299 = vcmp.eq.s32.totalorder %v271, %v220
    %vm300 = vcmp.eq.s32.totalorder %v274, %v220
    %vm301 = vcmp.eq.s32.totalorder %v277, %v220
    %vm302 = vcmp.eq.s32.totalorder %v280, %v220
    %vm303 = vcmp.eq.s32.totalorder %v283, %v220
    %vm304 = vcmp.eq.s32.totalorder %v286, %v220
    %vm305 = vcmp.eq.s32.totalorder %v289, %v220
    %v306 = vsel %vm290, 0.0, 1e+30
    %v307 = vsel %vm291, 0.0, 1e+30
    %v308 = vsel %vm292, 0.0, 1e+30
    %v309 = vsel %vm293, 0.0, 1e+30
    %v310 = vsel %vm294, 0.0, 1e+30
    %v311 = vsel %vm295, 0.0, 1e+30
    %v312 = vsel %vm296, 0.0, 1e+30
    %v313 = vsel %vm297, 0.0, 1e+30
    %v314 = vsel %vm298, 0.0, 1e+30
    %v315 = vsel %vm299, 0.0, 1e+30
    %v316 = vsel %vm300, 0.0, 1e+30
    %v317 = vsel %vm301, 0.0, 1e+30
    %v318 = vsel %vm302, 0.0, 1e+30
    %v319 = vsel %vm303, 0.0, 1e+30
    %v320 = vsel %vm304, 0.0, 1e+30
    %v321 = vsel %vm305, 0.0, 1e+30
    %v323 = vcombine.high %v213, %v213
    %v325 = vunpack.c.l.s4 1966171168
    %v326 = vunpack.c.0.s8 %v325
    %v327 = vlaneseq
    %v328 = vshrl.u32 %v327, 7
    %v329 = vsub.s32 %v326, %v328
    %v330 = vrot.slane %v213, %v329
    %v332 = vunpack.c.l.s4 1966171168
    %v333 = vunpack.c.0.s8 %v332
    %v334 = vlaneseq
    %v335 = vshrl.u32 %v334, 7
    %v336 = vsub.s32 %v333, %v335
    %v337 = vrot.slane %v323, %v336
    %v338 = vcombine.high %v330, %v330
    %v339 = vcombine.high %v337, %v337
    %v341 = vunpack.c.l.s4 1966171168
    %v342 = vunpack.c.0.s8 %v341
    %v343 = vlaneseq
    %v344 = vshrl.u32 %v343, 7
    %v345 = vsub.s32 %v342, %v344
    %v346 = vrot.slane %v330, %v345
    %v348 = vunpack.c.l.s4 1966171168
    %v349 = vunpack.c.0.s8 %v348
    %v350 = vlaneseq
    %v351 = vshrl.u32 %v350, 7
    %v352 = vsub.s32 %v349, %v351
    %v353 = vrot.slane %v337, %v352
    %v355 = vunpack.c.l.s4 1966171168
    %v356 = vunpack.c.0.s8 %v355
    %v357 = vlaneseq
    %v358 = vshrl.u32 %v357, 7
    %v359 = vsub.s32 %v356, %v358
    %v360 = vrot.slane %v338, %v359
    %v362 = vunpack.c.l.s4 1966171168
    %v363 = vunpack.c.0.s8 %v362
    %v364 = vlaneseq
    %v365 = vshrl.u32 %v364, 7
    %v366 = vsub.s32 %v363, %v365
    %v367 = vrot.slane %v339, %v366
    %v368 = vcombine.high %v346, %v346
    %v369 = vcombine.high %v353, %v353
    %v370 = vcombine.high %v360, %v360
    %v371 = vcombine.high %v367, %v367
    %v372 = vlaneseq
    %v373 = vshrl.u32 %v372, 7
    %v374 = vsub.s32 0, %v373
    %v375 = vrot.slane %v346, %v374
    %v376 = vlaneseq
    %v377 = vshrl.u32 %v376, 7
    %v378 = vsub.s32 0, %v377
    %v379 = vrot.slane %v360, %v378
    %v380 = vlaneseq
    %v381 = vshrl.u32 %v380, 7
    %v382 = vsub.s32 0, %v381
    %v383 = vrot.slane %v368, %v382
    %v384 = vlaneseq
    %v385 = vshrl.u32 %v384, 7
    %v386 = vsub.s32 0, %v385
    %v387 = vrot.slane %v370, %v386
    %v388 = vlaneseq
    %v389 = vshrl.u32 %v388, 7
    %v390 = vsub.s32 0, %v389
    %v391 = vrot.slane %v353, %v390
    %v392 = vlaneseq
    %v393 = vshrl.u32 %v392, 7
    %v394 = vsub.s32 0, %v393
    %v395 = vrot.slane %v367, %v394
    %v396 = vlaneseq
    %v397 = vshrl.u32 %v396, 7
    %v398 = vsub.s32 0, %v397
    %v399 = vrot.slane %v369, %v398
    %v400 = vlaneseq
    %v401 = vshrl.u32 %v400, 7
    %v402 = vsub.s32 0, %v401
    %v403 = vrot.slane %v371, %v402
    %v412 = vadd.f32 %v375, %v306
    %v413 = vadd.f32 %v375, %v307
    %v414 = vadd.f32 %v375, %v308
    %v415 = vadd.f32 %v375, %v309
    %v416 = vadd.f32 %v375, %v310
    %v417 = vadd.f32 %v375, %v311
    %v418 = vadd.f32 %v375, %v312
    %v419 = vadd.f32 %v375, %v313
    %v420 = vadd.f32 %v375, %v314
    %v421 = vadd.f32 %v375, %v315
    %v422 = vadd.f32 %v375, %v316
    %v423 = vadd.f32 %v375, %v317
    %v424 = vadd.f32 %v375, %v318
    %v425 = vadd.f32 %v375, %v319
    %v426 = vadd.f32 %v375, %v320
    %v427 = vadd.f32 %v375, %v321
    %v428 = vadd.f32 %v379, %v306
    %v429 = vadd.f32 %v379, %v307
    %v430 = vadd.f32 %v379, %v308
    %v431 = vadd.f32 %v379, %v309
    %v432 = vadd.f32 %v379, %v310
    %v433 = vadd.f32 %v379, %v311
    %v434 = vadd.f32 %v379, %v312
    %v435 = vadd.f32 %v379, %v313
    %v436 = vadd.f32 %v379, %v314
    %v437 = vadd.f32 %v379, %v315
    %v438 = vadd.f32 %v379, %v316
    %v439 = vadd.f32 %v379, %v317
    %v440 = vadd.f32 %v379, %v318
    %v441 = vadd.f32 %v379, %v319
    %v442 = vadd.f32 %v379, %v320
    %v443 = vadd.f32 %v379, %v321
    %v444 = vadd.f32 %v383, %v306
    %v445 = vadd.f32 %v383, %v307
    %v446 = vadd.f32 %v383, %v308
    %v447 = vadd.f32 %v383, %v309
    %v448 = vadd.f32 %v383, %v310
    %v449 = vadd.f32 %v383, %v311
    %v450 = vadd.f32 %v383, %v312
    %v451 = vadd.f32 %v383, %v313
    %v452 = vadd.f32 %v383, %v314
    %v453 = vadd.f32 %v383, %v315
    %v454 = vadd.f32 %v383, %v316
    %v455 = vadd.f32 %v383, %v317
    %v456 = vadd.f32 %v383, %v318
    %v457 = vadd.f32 %v383, %v319
    %v458 = vadd.f32 %v383, %v320
    %v459 = vadd.f32 %v383, %v321
    %v460 = vadd.f32 %v387, %v306
    %v461 = vadd.f32 %v387, %v307
    %v462 = vadd.f32 %v387, %v308
    %v463 = vadd.f32 %v387, %v309
    %v464 = vadd.f32 %v387, %v310
    %v465 = vadd.f32 %v387, %v311
    %v466 = vadd.f32 %v387, %v312
    %v467 = vadd.f32 %v387, %v313
    %v468 = vadd.f32 %v387, %v314
    %v469 = vadd.f32 %v387, %v315
    %v470 = vadd.f32 %v387, %v316
    %v471 = vadd.f32 %v387, %v317
    %v472 = vadd.f32 %v387, %v318
    %v473 = vadd.f32 %v387, %v319
    %v474 = vadd.f32 %v387, %v320
    %v475 = vadd.f32 %v387, %v321
    %v476 = vadd.f32 %v391, %v306
    %v477 = vadd.f32 %v391, %v307
    %v478 = vadd.f32 %v391, %v308
    %v479 = vadd.f32 %v391, %v309
    %v480 = vadd.f32 %v391, %v310
    %v481 = vadd.f32 %v391, %v311
    %v482 = vadd.f32 %v391, %v312
    %v483 = vadd.f32 %v391, %v313
    %v484 = vadd.f32 %v391, %v314
    %v485 = vadd.f32 %v391, %v315
    %v486 = vadd.f32 %v391, %v316
    %v487 = vadd.f32 %v391, %v317
    %v488 = vadd.f32 %v391, %v318
    %v489 = vadd.f32 %v391, %v319
    %v490 = vadd.f32 %v391, %v320
    %v491 = vadd.f32 %v391, %v321
    %v492 = vadd.f32 %v395, %v306
    %v493 = vadd.f32 %v395, %v307
    %v494 = vadd.f32 %v395, %v308
    %v495 = vadd.f32 %v395, %v309
    %v496 = vadd.f32 %v395, %v310
    %v497 = vadd.f32 %v395, %v311
    %v498 = vadd.f32 %v395, %v312
    %v499 = vadd.f32 %v395, %v313
    %v500 = vadd.f32 %v395, %v314
    %v501 = vadd.f32 %v395, %v315
    %v502 = vadd.f32 %v395, %v316
    %v503 = vadd.f32 %v395, %v317
    %v504 = vadd.f32 %v395, %v318
    %v505 = vadd.f32 %v395, %v319
    %v506 = vadd.f32 %v395, %v320
    %v507 = vadd.f32 %v395, %v321
    %v508 = vadd.f32 %v399, %v306
    %v509 = vadd.f32 %v399, %v307
    %v510 = vadd.f32 %v399, %v308
    %v511 = vadd.f32 %v399, %v309
    %v512 = vadd.f32 %v399, %v310
    %v513 = vadd.f32 %v399, %v311
    %v514 = vadd.f32 %v399, %v312
    %v515 = vadd.f32 %v399, %v313
    %v516 = vadd.f32 %v399, %v314
    %v517 = vadd.f32 %v399, %v315
    %v518 = vadd.f32 %v399, %v316
    %v519 = vadd.f32 %v399, %v317
    %v520 = vadd.f32 %v399, %v318
    %v521 = vadd.f32 %v399, %v319
    %v522 = vadd.f32 %v399, %v320
    %v523 = vadd.f32 %v399, %v321
    %v524 = vadd.f32 %v403, %v306
    %v525 = vadd.f32 %v403, %v307
    %v526 = vadd.f32 %v403, %v308
    %v527 = vadd.f32 %v403, %v309
    %v528 = vadd.f32 %v403, %v310
    %v529 = vadd.f32 %v403, %v311
    %v530 = vadd.f32 %v403, %v312
    %v531 = vadd.f32 %v403, %v313
    %v532 = vadd.f32 %v403, %v314
    %v533 = vadd.f32 %v403, %v315
    %v534 = vadd.f32 %v403, %v316
    %v535 = vadd.f32 %v403, %v317
    %v536 = vadd.f32 %v403, %v318
    %v537 = vadd.f32 %v403, %v319
    %v538 = vadd.f32 %v403, %v320
    %v539 = vadd.f32 %v403, %v321
    %540 = vmin.xlane.f32.xlu0 %v412
    %v541 = vpop.xlane.xlu0 %540
    %542 = vmin.xlane.f32.xlu0 %v413
    %v543 = vpop.xlane.xlu0 %542
    %544 = vmin.xlane.f32.xlu0 %v414
    %v545 = vpop.xlane.xlu0 %544
    %546 = vmin.xlane.f32.xlu0 %v415
    %v547 = vpop.xlane.xlu0 %546
    %548 = vmin.xlane.f32.xlu0 %v416
    %v549 = vpop.xlane.xlu0 %548
    %550 = vmin.xlane.f32.xlu0 %v417
    %v551 = vpop.xlane.xlu0 %550
    %552 = vmin.xlane.f32.xlu0 %v418
    %v553 = vpop.xlane.xlu0 %552
    %554 = vmin.xlane.f32.xlu0 %v419
    %v555 = vpop.xlane.xlu0 %554
    %556 = vmin.xlane.f32.xlu0 %v420
    %v557 = vpop.xlane.xlu0 %556
    %558 = vmin.xlane.f32.xlu0 %v421
    %v559 = vpop.xlane.xlu0 %558
    %560 = vmin.xlane.f32.xlu0 %v422
    %v561 = vpop.xlane.xlu0 %560
    %562 = vmin.xlane.f32.xlu0 %v423
    %v563 = vpop.xlane.xlu0 %562
    %564 = vmin.xlane.f32.xlu0 %v424
    %v565 = vpop.xlane.xlu0 %564
    %566 = vmin.xlane.f32.xlu0 %v425
    %v567 = vpop.xlane.xlu0 %566
    %568 = vmin.xlane.f32.xlu0 %v426
    %v569 = vpop.xlane.xlu0 %568
    %570 = vmin.xlane.f32.xlu0 %v427
    %v571 = vpop.xlane.xlu0 %570
    %572 = vmin.xlane.f32.xlu0 %v428
    %v573 = vpop.xlane.xlu0 %572
    %574 = vmin.xlane.f32.xlu0 %v429
    %v575 = vpop.xlane.xlu0 %574
    %576 = vmin.xlane.f32.xlu0 %v430
    %v577 = vpop.xlane.xlu0 %576
    %578 = vmin.xlane.f32.xlu0 %v431
    %v579 = vpop.xlane.xlu0 %578
    %580 = vmin.xlane.f32.xlu0 %v432
    %v581 = vpop.xlane.xlu0 %580
    %582 = vmin.xlane.f32.xlu0 %v433
    %v583 = vpop.xlane.xlu0 %582
    %584 = vmin.xlane.f32.xlu0 %v434
    %v585 = vpop.xlane.xlu0 %584
    %586 = vmin.xlane.f32.xlu0 %v435
    %v587 = vpop.xlane.xlu0 %586
    %588 = vmin.xlane.f32.xlu0 %v436
    %v589 = vpop.xlane.xlu0 %588
    %590 = vmin.xlane.f32.xlu0 %v437
    %v591 = vpop.xlane.xlu0 %590
    %592 = vmin.xlane.f32.xlu0 %v438
    %v593 = vpop.xlane.xlu0 %592
    %594 = vmin.xlane.f32.xlu0 %v439
    %v595 = vpop.xlane.xlu0 %594
    %596 = vmin.xlane.f32.xlu0 %v440
    %v597 = vpop.xlane.xlu0 %596
    %598 = vmin.xlane.f32.xlu0 %v441
    %v599 = vpop.xlane.xlu0 %598
    %600 = vmin.xlane.f32.xlu0 %v442
    %v601 = vpop.xlane.xlu0 %600
    %602 = vmin.xlane.f32.xlu0 %v443
    %v603 = vpop.xlane.xlu0 %602
    %604 = vmin.xlane.f32.xlu0 %v444
    %v605 = vpop.xlane.xlu0 %604
    %606 = vmin.xlane.f32.xlu0 %v445
    %v607 = vpop.xlane.xlu0 %606
    %608 = vmin.xlane.f32.xlu0 %v446
    %v609 = vpop.xlane.xlu0 %608
    %610 = vmin.xlane.f32.xlu0 %v447
    %v611 = vpop.xlane.xlu0 %610
    %612 = vmin.xlane.f32.xlu0 %v448
    %v613 = vpop.xlane.xlu0 %612
    %614 = vmin.xlane.f32.xlu0 %v449
    %v615 = vpop.xlane.xlu0 %614
    %616 = vmin.xlane.f32.xlu0 %v450
    %v617 = vpop.xlane.xlu0 %616
    %618 = vmin.xlane.f32.xlu0 %v451
    %v619 = vpop.xlane.xlu0 %618
    %620 = vmin.xlane.f32.xlu0 %v452
    %v621 = vpop.xlane.xlu0 %620
    %622 = vmin.xlane.f32.xlu0 %v453
    %v623 = vpop.xlane.xlu0 %622
    %624 = vmin.xlane.f32.xlu0 %v454
    %v625 = vpop.xlane.xlu0 %624
    %626 = vmin.xlane.f32.xlu0 %v455
    %v627 = vpop.xlane.xlu0 %626
    %628 = vmin.xlane.f32.xlu0 %v456
    %v629 = vpop.xlane.xlu0 %628
    %630 = vmin.xlane.f32.xlu0 %v457
    %v631 = vpop.xlane.xlu0 %630
    %632 = vmin.xlane.f32.xlu0 %v458
    %v633 = vpop.xlane.xlu0 %632
    %634 = vmin.xlane.f32.xlu0 %v459
    %v635 = vpop.xlane.xlu0 %634
    %636 = vmin.xlane.f32.xlu0 %v460
    %v637 = vpop.xlane.xlu0 %636
    %638 = vmin.xlane.f32.xlu0 %v461
    %v639 = vpop.xlane.xlu0 %638
    %640 = vmin.xlane.f32.xlu0 %v462
    %v641 = vpop.xlane.xlu0 %640
    %642 = vmin.xlane.f32.xlu0 %v463
    %v643 = vpop.xlane.xlu0 %642
    %644 = vmin.xlane.f32.xlu0 %v464
    %v645 = vpop.xlane.xlu0 %644
    %646 = vmin.xlane.f32.xlu0 %v465
    %v647 = vpop.xlane.xlu0 %646
    %648 = vmin.xlane.f32.xlu0 %v466
    %v649 = vpop.xlane.xlu0 %648
    %650 = vmin.xlane.f32.xlu0 %v467
    %v651 = vpop.xlane.xlu0 %650
    %652 = vmin.xlane.f32.xlu0 %v468
    %v653 = vpop.xlane.xlu0 %652
    %654 = vmin.xlane.f32.xlu0 %v469
    %v655 = vpop.xlane.xlu0 %654
    %656 = vmin.xlane.f32.xlu0 %v470
    %v657 = vpop.xlane.xlu0 %656
    %658 = vmin.xlane.f32.xlu0 %v471
    %v659 = vpop.xlane.xlu0 %658
    %660 = vmin.xlane.f32.xlu0 %v472
    %v661 = vpop.xlane.xlu0 %660
    %662 = vmin.xlane.f32.xlu0 %v473
    %v663 = vpop.xlane.xlu0 %662
    %664 = vmin.xlane.f32.xlu0 %v474
    %v665 = vpop.xlane.xlu0 %664
    %666 = vmin.xlane.f32.xlu0 %v475
    %v667 = vpop.xlane.xlu0 %666
    %668 = vmin.xlane.f32.xlu0 %v476
    %v669 = vpop.xlane.xlu0 %668
    %670 = vmin.xlane.f32.xlu0 %v477
    %v671 = vpop.xlane.xlu0 %670
    %672 = vmin.xlane.f32.xlu0 %v478
    %v673 = vpop.xlane.xlu0 %672
    %674 = vmin.xlane.f32.xlu0 %v479
    %v675 = vpop.xlane.xlu0 %674
    %676 = vmin.xlane.f32.xlu0 %v480
    %v677 = vpop.xlane.xlu0 %676
    %678 = vmin.xlane.f32.xlu0 %v481
    %v679 = vpop.xlane.xlu0 %678
    %680 = vmin.xlane.f32.xlu0 %v482
    %v681 = vpop.xlane.xlu0 %680
    %682 = vmin.xlane.f32.xlu0 %v483
    %v683 = vpop.xlane.xlu0 %682
    %684 = vmin.xlane.f32.xlu0 %v484
    %v685 = vpop.xlane.xlu0 %684
    %686 = vmin.xlane.f32.xlu0 %v485
    %v687 = vpop.xlane.xlu0 %686
    %688 = vmin.xlane.f32.xlu0 %v486
    %v689 = vpop.xlane.xlu0 %688
    %690 = vmin.xlane.f32.xlu0 %v487
    %v691 = vpop.xlane.xlu0 %690
    %692 = vmin.xlane.f32.xlu0 %v488
    %v693 = vpop.xlane.xlu0 %692
    %694 = vmin.xlane.f32.xlu0 %v489
    %v695 = vpop.xlane.xlu0 %694
    %696 = vmin.xlane.f32.xlu0 %v490
    %v697 = vpop.xlane.xlu0 %696
    %698 = vmin.xlane.f32.xlu0 %v491
    %v699 = vpop.xlane.xlu0 %698
    %700 = vmin.xlane.f32.xlu0 %v492
    %v701 = vpop.xlane.xlu0 %700
    %702 = vmin.xlane.f32.xlu0 %v493
    %v703 = vpop.xlane.xlu0 %702
    %704 = vmin.xlane.f32.xlu0 %v494
    %v705 = vpop.xlane.xlu0 %704
    %706 = vmin.xlane.f32.xlu0 %v495
    %v707 = vpop.xlane.xlu0 %706
    %708 = vmin.xlane.f32.xlu0 %v496
    %v709 = vpop.xlane.xlu0 %708
    %710 = vmin.xlane.f32.xlu0 %v497
    %v711 = vpop.xlane.xlu0 %710
    %712 = vmin.xlane.f32.xlu0 %v498
    %v713 = vpop.xlane.xlu0 %712
    %714 = vmin.xlane.f32.xlu0 %v499
    %v715 = vpop.xlane.xlu0 %714
    %716 = vmin.xlane.f32.xlu0 %v500
    %v717 = vpop.xlane.xlu0 %716
    %718 = vmin.xlane.f32.xlu0 %v501
    %v719 = vpop.xlane.xlu0 %718
    %720 = vmin.xlane.f32.xlu0 %v502
    %v721 = vpop.xlane.xlu0 %720
    %722 = vmin.xlane.f32.xlu0 %v503
    %v723 = vpop.xlane.xlu0 %722
    %724 = vmin.xlane.f32.xlu0 %v504
    %v725 = vpop.xlane.xlu0 %724
    %726 = vmin.xlane.f32.xlu0 %v505
    %v727 = vpop.xlane.xlu0 %726
    %728 = vmin.xlane.f32.xlu0 %v506
    %v729 = vpop.xlane.xlu0 %728
    %730 = vmin.xlane.f32.xlu0 %v507
    %v731 = vpop.xlane.xlu0 %730
    %732 = vmin.xlane.f32.xlu0 %v508
    %v733 = vpop.xlane.xlu0 %732
    %734 = vmin.xlane.f32.xlu0 %v509
    %v735 = vpop.xlane.xlu0 %734
    %736 = vmin.xlane.f32.xlu0 %v510
    %v737 = vpop.xlane.xlu0 %736
    %738 = vmin.xlane.f32.xlu0 %v511
    %v739 = vpop.xlane.xlu0 %738
    %740 = vmin.xlane.f32.xlu0 %v512
    %v741 = vpop.xlane.xlu0 %740
    %742 = vmin.xlane.f32.xlu0 %v513
    %v743 = vpop.xlane.xlu0 %742
    %744 = vmin.xlane.f32.xlu0 %v514
    %v745 = vpop.xlane.xlu0 %744
    %746 = vmin.xlane.f32.xlu0 %v515
    %v747 = vpop.xlane.xlu0 %746
    %748 = vmin.xlane.f32.xlu0 %v516
    %v749 = vpop.xlane.xlu0 %748
    %750 = vmin.xlane.f32.xlu0 %v517
    %v751 = vpop.xlane.xlu0 %750
    %752 = vmin.xlane.f32.xlu0 %v518
    %v753 = vpop.xlane.xlu0 %752
    %754 = vmin.xlane.f32.xlu0 %v519
    %v755 = vpop.xlane.xlu0 %754
    %756 = vmin.xlane.f32.xlu0 %v520
    %v757 = vpop.xlane.xlu0 %756
    %758 = vmin.xlane.f32.xlu0 %v521
    %v759 = vpop.xlane.xlu0 %758
    %760 = vmin.xlane.f32.xlu0 %v522
    %v761 = vpop.xlane.xlu0 %760
    %762 = vmin.xlane.f32.xlu0 %v523
    %v763 = vpop.xlane.xlu0 %762
    %764 = vmin.xlane.f32.xlu0 %v524
    %v765 = vpop.xlane.xlu0 %764
    %766 = vmin.xlane.f32.xlu0 %v525
    %v767 = vpop.xlane.xlu0 %766
    %768 = vmin.xlane.f32.xlu0 %v526
    %v769 = vpop.xlane.xlu0 %768
    %770 = vmin.xlane.f32.xlu0 %v527
    %v771 = vpop.xlane.xlu0 %770
    %772 = vmin.xlane.f32.xlu0 %v528
    %v773 = vpop.xlane.xlu0 %772
    %774 = vmin.xlane.f32.xlu0 %v529
    %v775 = vpop.xlane.xlu0 %774
    %776 = vmin.xlane.f32.xlu0 %v530
    %v777 = vpop.xlane.xlu0 %776
    %778 = vmin.xlane.f32.xlu0 %v531
    %v779 = vpop.xlane.xlu0 %778
    %780 = vmin.xlane.f32.xlu0 %v532
    %v781 = vpop.xlane.xlu0 %780
    %782 = vmin.xlane.f32.xlu0 %v533
    %v783 = vpop.xlane.xlu0 %782
    %784 = vmin.xlane.f32.xlu0 %v534
    %v785 = vpop.xlane.xlu0 %784
    %786 = vmin.xlane.f32.xlu0 %v535
    %v787 = vpop.xlane.xlu0 %786
    %788 = vmin.xlane.f32.xlu0 %v536
    %v789 = vpop.xlane.xlu0 %788
    %790 = vmin.xlane.f32.xlu0 %v537
    %v791 = vpop.xlane.xlu0 %790
    %792 = vmin.xlane.f32.xlu0 %v538
    %v793 = vpop.xlane.xlu0 %792
    %794 = vmin.xlane.f32.xlu0 %v539
    %v795 = vpop.xlane.xlu0 %794
    %vm796 = vcmp.gt.f32.partialorder %v72, 0.0
    %v797 = vsel %vm796, 1, 0
    %vm798 = vcmp.eq.s32.totalorder %v797, 1
    %v927 = vlaneseq
    %v928 = vshrl.u32 %v927, 7
    %v929 = vsub.s32 %v69, %v928
    %v930 = vrot.slane %v541, %v929
    %v931 = vadd.s32 %v69, 4294967288
    %v932 = vlaneseq
    %v933 = vshrl.u32 %v932, 7
    %v934 = vsub.s32 %v931, %v933
    %v935 = vrot.slane %v543, %v934
    %vm936 = vcmask 130112
    %v937 = vsel %vm936, %v935, %v930
    %v938 = vadd.s32 %v69, 4294967280
    %v939 = vlaneseq
    %v940 = vshrl.u32 %v939, 7
    %v941 = vsub.s32 %v938, %v940
    %v942 = vrot.slane %v545, %v941
    %vm943 = vcmask 195712
    %v944 = vsel %vm943, %v942, %v937
    %v945 = vadd.s32 %v69, 4294967272
    %v946 = vlaneseq
    %v947 = vshrl.u32 %v946, 7
    %v948 = vsub.s32 %v945, %v947
    %v949 = vrot.slane %v547, %v948
    %vm950 = vcmask 261312
    %v951 = vsel %vm950, %v949, %v944
    %v952 = vadd.s32 %v69, 4294967264
    %v953 = vlaneseq
    %v954 = vshrl.u32 %v953, 7
    %v955 = vsub.s32 %v952, %v954
    %v956 = vrot.slane %v549, %v955
    %vm957 = vcmask 326912
    %v958 = vsel %vm957, %v956, %v951
    %v959 = vadd.s32 %v69, 4294967256
    %v960 = vlaneseq
    %v961 = vshrl.u32 %v960, 7
    %v962 = vsub.s32 %v959, %v961
    %v963 = vrot.slane %v551, %v962
    %vm964 = vcmask 392512
    %v965 = vsel %vm964, %v963, %v958
    %v966 = vadd.s32 %v69, 4294967248
    %v967 = vlaneseq
    %v968 = vshrl.u32 %v967, 7
    %v969 = vsub.s32 %v966, %v968
    %v970 = vrot.slane %v553, %v969
    %vm971 = vcmask 458112
    %v972 = vsel %vm971, %v970, %v965
    %v973 = vadd.s32 %v69, 4294967240
    %v974 = vlaneseq
    %v975 = vshrl.u32 %v974, 7
    %v976 = vsub.s32 %v973, %v975
    %v977 = vrot.slane %v555, %v976
    %vm978 = vcmask 523712
    %v979 = vsel %vm978, %v977, %v972
    %v980 = vadd.s32 %v69, 4294967232
    %v981 = vlaneseq
    %v982 = vshrl.u32 %v981, 7
    %v983 = vsub.s32 %v980, %v982
    %v984 = vrot.slane %v557, %v983
    %vm985 = vcmask 589312
    %v986 = vsel %vm985, %v984, %v979
    %v987 = vadd.s32 %v69, 4294967224
    %v988 = vlaneseq
    %v989 = vshrl.u32 %v988, 7
    %v990 = vsub.s32 %v987, %v989
    %v991 = vrot.slane %v559, %v990
    %vm992 = vcmask 654912
    %v993 = vsel %vm992, %v991, %v986
    %v994 = vadd.s32 %v69, 4294967216
    %v995 = vlaneseq
    %v996 = vshrl.u32 %v995, 7
    %v997 = vsub.s32 %v994, %v996
    %v998 = vrot.slane %v561, %v997
    %vm999 = vcmask 720512
    %v1000 = vsel %vm999, %v998, %v993
    %v1001 = vadd.s32 %v69, 4294967208
    %v1002 = vlaneseq
    %v1003 = vshrl.u32 %v1002, 7
    %v1004 = vsub.s32 %v1001, %v1003
    %v1005 = vrot.slane %v563, %v1004
    %vm1006 = vcmask 786112
    %v1007 = vsel %vm1006, %v1005, %v1000
    %v1008 = vadd.s32 %v69, 4294967200
    %v1009 = vlaneseq
    %v1010 = vshrl.u32 %v1009, 7
    %v1011 = vsub.s32 %v1008, %v1010
    %v1012 = vrot.slane %v565, %v1011
    %vm1013 = vcmask 851712
    %v1014 = vsel %vm1013, %v1012, %v1007
    %v1015 = vadd.s32 %v69, 4294967192
    %v1016 = vlaneseq
    %v1017 = vshrl.u32 %v1016, 7
    %v1018 = vsub.s32 %v1015, %v1017
    %v1019 = vrot.slane %v567, %v1018
    %vm1020 = vcmask 917312
    %v1021 = vsel %vm1020, %v1019, %v1014
    %v1022 = vadd.s32 %v69, 4294967184
    %v1023 = vlaneseq
    %v1024 = vshrl.u32 %v1023, 7
    %v1025 = vsub.s32 %v1022, %v1024
    %v1026 = vrot.slane %v569, %v1025
    %vm1027 = vcmask 982912
    %v1028 = vsel %vm1027, %v1026, %v1021
    %v1029 = vadd.s32 %v69, 4294967176
    %v1030 = vlaneseq
    %v1031 = vshrl.u32 %v1030, 7
    %v1032 = vsub.s32 %v1029, %v1031
    %v1033 = vrot.slane %v571, %v1032
    %vm1034 = vcmask 1048512
    %v1035 = vsel %vm1034, %v1033, %v1028
    %v1036 = vlaneseq
    %v1037 = vshrl.u32 %v1036, 7
    %v1038 = vsub.s32 %v69, %v1037
    %v1039 = vrot.slane %v573, %v1038
    %v1040 = vlaneseq
    %v1041 = vshrl.u32 %v1040, 7
    %v1042 = vsub.s32 %v931, %v1041
    %v1043 = vrot.slane %v575, %v1042
    %v1044 = vsel %vm936, %v1043, %v1039
    %v1045 = vlaneseq
    %v1046 = vshrl.u32 %v1045, 7
    %v1047 = vsub.s32 %v938, %v1046
    %v1048 = vrot.slane %v577, %v1047
    %v1049 = vsel %vm943, %v1048, %v1044
    %v1050 = vlaneseq
    %v1051 = vshrl.u32 %v1050, 7
    %v1052 = vsub.s32 %v945, %v1051
    %v1053 = vrot.slane %v579, %v1052
    %v1054 = vsel %vm950, %v1053, %v1049
    %v1055 = vlaneseq
    %v1056 = vshrl.u32 %v1055, 7
    %v1057 = vsub.s32 %v952, %v1056
    %v1058 = vrot.slane %v581, %v1057
    %v1059 = vsel %vm957, %v1058, %v1054
    %v1060 = vlaneseq
    %v1061 = vshrl.u32 %v1060, 7
    %v1062 = vsub.s32 %v959, %v1061
    %v1063 = vrot.slane %v583, %v1062
    %v1064 = vsel %vm964, %v1063, %v1059
    %v1065 = vlaneseq
    %v1066 = vshrl.u32 %v1065, 7
    %v1067 = vsub.s32 %v966, %v1066
    %v1068 = vrot.slane %v585, %v1067
    %v1069 = vsel %vm971, %v1068, %v1064
    %v1070 = vlaneseq
    %v1071 = vshrl.u32 %v1070, 7
    %v1072 = vsub.s32 %v973, %v1071
    %v1073 = vrot.slane %v587, %v1072
    %v1074 = vsel %vm978, %v1073, %v1069
    %v1075 = vlaneseq
    %v1076 = vshrl.u32 %v1075, 7
    %v1077 = vsub.s32 %v980, %v1076
    %v1078 = vrot.slane %v589, %v1077
    %v1079 = vsel %vm985, %v1078, %v1074
    %v1080 = vlaneseq
    %v1081 = vshrl.u32 %v1080, 7
    %v1082 = vsub.s32 %v987, %v1081
    %v1083 = vrot.slane %v591, %v1082
    %v1084 = vsel %vm992, %v1083, %v1079
    %v1085 = vlaneseq
    %v1086 = vshrl.u32 %v1085, 7
    %v1087 = vsub.s32 %v994, %v1086
    %v1088 = vrot.slane %v593, %v1087
    %v1089 = vsel %vm999, %v1088, %v1084
    %v1090 = vlaneseq
    %v1091 = vshrl.u32 %v1090, 7
    %v1092 = vsub.s32 %v1001, %v1091
    %v1093 = vrot.slane %v595, %v1092
    %v1094 = vsel %vm1006, %v1093, %v1089
    %v1095 = vlaneseq
    %v1096 = vshrl.u32 %v1095, 7
    %v1097 = vsub.s32 %v1008, %v1096
    %v1098 = vrot.slane %v597, %v1097
    %v1099 = vsel %vm1013, %v1098, %v1094
    %v1100 = vlaneseq
    %v1101 = vshrl.u32 %v1100, 7
    %v1102 = vsub.s32 %v1015, %v1101
    %v1103 = vrot.slane %v599, %v1102
    %v1104 = vsel %vm1020, %v1103, %v1099
    %v1105 = vlaneseq
    %v1106 = vshrl.u32 %v1105, 7
    %v1107 = vsub.s32 %v1022, %v1106
    %v1108 = vrot.slane %v601, %v1107
    %v1109 = vsel %vm1027, %v1108, %v1104
    %v1110 = vlaneseq
    %v1111 = vshrl.u32 %v1110, 7
    %v1112 = vsub.s32 %v1029, %v1111
    %v1113 = vrot.slane %v603, %v1112
    %v1114 = vsel %vm1034, %v1113, %v1109
    %v1115 = vlaneseq
    %v1116 = vshrl.u32 %v1115, 7
    %v1117 = vsub.s32 %v69, %v1116
    %v1118 = vrot.slane %v605, %v1117
    %v1119 = vlaneseq
    %v1120 = vshrl.u32 %v1119, 7
    %v1121 = vsub.s32 %v931, %v1120
    %v1122 = vrot.slane %v607, %v1121
    %v1123 = vsel %vm936, %v1122, %v1118
    %v1124 = vlaneseq
    %v1125 = vshrl.u32 %v1124, 7
    %v1126 = vsub.s32 %v938, %v1125
    %v1127 = vrot.slane %v609, %v1126
    %v1128 = vsel %vm943, %v1127, %v1123
    %v1129 = vlaneseq
    %v1130 = vshrl.u32 %v1129, 7
    %v1131 = vsub.s32 %v945, %v1130
    %v1132 = vrot.slane %v611, %v1131
    %v1133 = vsel %vm950, %v1132, %v1128
    %v1134 = vlaneseq
    %v1135 = vshrl.u32 %v1134, 7
    %v1136 = vsub.s32 %v952, %v1135
    %v1137 = vrot.slane %v613, %v1136
    %v1138 = vsel %vm957, %v1137, %v1133
    %v1139 = vlaneseq
    %v1140 = vshrl.u32 %v1139, 7
    %v1141 = vsub.s32 %v959, %v1140
    %v1142 = vrot.slane %v615, %v1141
    %v1143 = vsel %vm964, %v1142, %v1138
    %v1144 = vlaneseq
    %v1145 = vshrl.u32 %v1144, 7
    %v1146 = vsub.s32 %v966, %v1145
    %v1147 = vrot.slane %v617, %v1146
    %v1148 = vsel %vm971, %v1147, %v1143
    %v1149 = vlaneseq
    %v1150 = vshrl.u32 %v1149, 7
    %v1151 = vsub.s32 %v973, %v1150
    %v1152 = vrot.slane %v619, %v1151
    %v1153 = vsel %vm978, %v1152, %v1148
    %v1154 = vlaneseq
    %v1155 = vshrl.u32 %v1154, 7
    %v1156 = vsub.s32 %v980, %v1155
    %v1157 = vrot.slane %v621, %v1156
    %v1158 = vsel %vm985, %v1157, %v1153
    %v1159 = vlaneseq
    %v1160 = vshrl.u32 %v1159, 7
    %v1161 = vsub.s32 %v987, %v1160
    %v1162 = vrot.slane %v623, %v1161
    %v1163 = vsel %vm992, %v1162, %v1158
    %v1164 = vlaneseq
    %v1165 = vshrl.u32 %v1164, 7
    %v1166 = vsub.s32 %v994, %v1165
    %v1167 = vrot.slane %v625, %v1166
    %v1168 = vsel %vm999, %v1167, %v1163
    %v1169 = vlaneseq
    %v1170 = vshrl.u32 %v1169, 7
    %v1171 = vsub.s32 %v1001, %v1170
    %v1172 = vrot.slane %v627, %v1171
    %v1173 = vsel %vm1006, %v1172, %v1168
    %v1174 = vlaneseq
    %v1175 = vshrl.u32 %v1174, 7
    %v1176 = vsub.s32 %v1008, %v1175
    %v1177 = vrot.slane %v629, %v1176
    %v1178 = vsel %vm1013, %v1177, %v1173
    %v1179 = vlaneseq
    %v1180 = vshrl.u32 %v1179, 7
    %v1181 = vsub.s32 %v1015, %v1180
    %v1182 = vrot.slane %v631, %v1181
    %v1183 = vsel %vm1020, %v1182, %v1178
    %v1184 = vlaneseq
    %v1185 = vshrl.u32 %v1184, 7
    %v1186 = vsub.s32 %v1022, %v1185
    %v1187 = vrot.slane %v633, %v1186
    %v1188 = vsel %vm1027, %v1187, %v1183
    %v1189 = vlaneseq
    %v1190 = vshrl.u32 %v1189, 7
    %v1191 = vsub.s32 %v1029, %v1190
    %v1192 = vrot.slane %v635, %v1191
    %v1193 = vsel %vm1034, %v1192, %v1188
    %v1194 = vlaneseq
    %v1195 = vshrl.u32 %v1194, 7
    %v1196 = vsub.s32 %v69, %v1195
    %v1197 = vrot.slane %v637, %v1196
    %v1198 = vlaneseq
    %v1199 = vshrl.u32 %v1198, 7
    %v1200 = vsub.s32 %v931, %v1199
    %v1201 = vrot.slane %v639, %v1200
    %v1202 = vsel %vm936, %v1201, %v1197
    %v1203 = vlaneseq
    %v1204 = vshrl.u32 %v1203, 7
    %v1205 = vsub.s32 %v938, %v1204
    %v1206 = vrot.slane %v641, %v1205
    %v1207 = vsel %vm943, %v1206, %v1202
    %v1208 = vlaneseq
    %v1209 = vshrl.u32 %v1208, 7
    %v1210 = vsub.s32 %v945, %v1209
    %v1211 = vrot.slane %v643, %v1210
    %v1212 = vsel %vm950, %v1211, %v1207
    %v1213 = vlaneseq
    %v1214 = vshrl.u32 %v1213, 7
    %v1215 = vsub.s32 %v952, %v1214
    %v1216 = vrot.slane %v645, %v1215
    %v1217 = vsel %vm957, %v1216, %v1212
    %v1218 = vlaneseq
    %v1219 = vshrl.u32 %v1218, 7
    %v1220 = vsub.s32 %v959, %v1219
    %v1221 = vrot.slane %v647, %v1220
    %v1222 = vsel %vm964, %v1221, %v1217
    %v1223 = vlaneseq
    %v1224 = vshrl.u32 %v1223, 7
    %v1225 = vsub.s32 %v966, %v1224
    %v1226 = vrot.slane %v649, %v1225
    %v1227 = vsel %vm971, %v1226, %v1222
    %v1228 = vlaneseq
    %v1229 = vshrl.u32 %v1228, 7
    %v1230 = vsub.s32 %v973, %v1229
    %v1231 = vrot.slane %v651, %v1230
    %v1232 = vsel %vm978, %v1231, %v1227
    %v1233 = vlaneseq
    %v1234 = vshrl.u32 %v1233, 7
    %v1235 = vsub.s32 %v980, %v1234
    %v1236 = vrot.slane %v653, %v1235
    %v1237 = vsel %vm985, %v1236, %v1232
    %v1238 = vlaneseq
    %v1239 = vshrl.u32 %v1238, 7
    %v1240 = vsub.s32 %v987, %v1239
    %v1241 = vrot.slane %v655, %v1240
    %v1242 = vsel %vm992, %v1241, %v1237
    %v1243 = vlaneseq
    %v1244 = vshrl.u32 %v1243, 7
    %v1245 = vsub.s32 %v994, %v1244
    %v1246 = vrot.slane %v657, %v1245
    %v1247 = vsel %vm999, %v1246, %v1242
    %v1248 = vlaneseq
    %v1249 = vshrl.u32 %v1248, 7
    %v1250 = vsub.s32 %v1001, %v1249
    %v1251 = vrot.slane %v659, %v1250
    %v1252 = vsel %vm1006, %v1251, %v1247
    %v1253 = vlaneseq
    %v1254 = vshrl.u32 %v1253, 7
    %v1255 = vsub.s32 %v1008, %v1254
    %v1256 = vrot.slane %v661, %v1255
    %v1257 = vsel %vm1013, %v1256, %v1252
    %v1258 = vlaneseq
    %v1259 = vshrl.u32 %v1258, 7
    %v1260 = vsub.s32 %v1015, %v1259
    %v1261 = vrot.slane %v663, %v1260
    %v1262 = vsel %vm1020, %v1261, %v1257
    %v1263 = vlaneseq
    %v1264 = vshrl.u32 %v1263, 7
    %v1265 = vsub.s32 %v1022, %v1264
    %v1266 = vrot.slane %v665, %v1265
    %v1267 = vsel %vm1027, %v1266, %v1262
    %v1268 = vlaneseq
    %v1269 = vshrl.u32 %v1268, 7
    %v1270 = vsub.s32 %v1029, %v1269
    %v1271 = vrot.slane %v667, %v1270
    %v1272 = vsel %vm1034, %v1271, %v1267
    %v1273 = vlaneseq
    %v1274 = vshrl.u32 %v1273, 7
    %v1275 = vsub.s32 %v69, %v1274
    %v1276 = vrot.slane %v669, %v1275
    %v1277 = vlaneseq
    %v1278 = vshrl.u32 %v1277, 7
    %v1279 = vsub.s32 %v931, %v1278
    %v1280 = vrot.slane %v671, %v1279
    %v1281 = vsel %vm936, %v1280, %v1276
    %v1282 = vlaneseq
    %v1283 = vshrl.u32 %v1282, 7
    %v1284 = vsub.s32 %v938, %v1283
    %v1285 = vrot.slane %v673, %v1284
    %v1286 = vsel %vm943, %v1285, %v1281
    %v1287 = vlaneseq
    %v1288 = vshrl.u32 %v1287, 7
    %v1289 = vsub.s32 %v945, %v1288
    %v1290 = vrot.slane %v675, %v1289
    %v1291 = vsel %vm950, %v1290, %v1286
    %v1292 = vlaneseq
    %v1293 = vshrl.u32 %v1292, 7
    %v1294 = vsub.s32 %v952, %v1293
    %v1295 = vrot.slane %v677, %v1294
    %v1296 = vsel %vm957, %v1295, %v1291
    %v1297 = vlaneseq
    %v1298 = vshrl.u32 %v1297, 7
    %v1299 = vsub.s32 %v959, %v1298
    %v1300 = vrot.slane %v679, %v1299
    %v1301 = vsel %vm964, %v1300, %v1296
    %v1302 = vlaneseq
    %v1303 = vshrl.u32 %v1302, 7
    %v1304 = vsub.s32 %v966, %v1303
    %v1305 = vrot.slane %v681, %v1304
    %v1306 = vsel %vm971, %v1305, %v1301
    %v1307 = vlaneseq
    %v1308 = vshrl.u32 %v1307, 7
    %v1309 = vsub.s32 %v973, %v1308
    %v1310 = vrot.slane %v683, %v1309
    %v1311 = vsel %vm978, %v1310, %v1306
    %v1312 = vlaneseq
    %v1313 = vshrl.u32 %v1312, 7
    %v1314 = vsub.s32 %v980, %v1313
    %v1315 = vrot.slane %v685, %v1314
    %v1316 = vsel %vm985, %v1315, %v1311
    %v1317 = vlaneseq
    %v1318 = vshrl.u32 %v1317, 7
    %v1319 = vsub.s32 %v987, %v1318
    %v1320 = vrot.slane %v687, %v1319
    %v1321 = vsel %vm992, %v1320, %v1316
    %v1322 = vlaneseq
    %v1323 = vshrl.u32 %v1322, 7
    %v1324 = vsub.s32 %v994, %v1323
    %v1325 = vrot.slane %v689, %v1324
    %v1326 = vsel %vm999, %v1325, %v1321
    %v1327 = vlaneseq
    %v1328 = vshrl.u32 %v1327, 7
    %v1329 = vsub.s32 %v1001, %v1328
    %v1330 = vrot.slane %v691, %v1329
    %v1331 = vsel %vm1006, %v1330, %v1326
    %v1332 = vlaneseq
    %v1333 = vshrl.u32 %v1332, 7
    %v1334 = vsub.s32 %v1008, %v1333
    %v1335 = vrot.slane %v693, %v1334
    %v1336 = vsel %vm1013, %v1335, %v1331
    %v1337 = vlaneseq
    %v1338 = vshrl.u32 %v1337, 7
    %v1339 = vsub.s32 %v1015, %v1338
    %v1340 = vrot.slane %v695, %v1339
    %v1341 = vsel %vm1020, %v1340, %v1336
    %v1342 = vlaneseq
    %v1343 = vshrl.u32 %v1342, 7
    %v1344 = vsub.s32 %v1022, %v1343
    %v1345 = vrot.slane %v697, %v1344
    %v1346 = vsel %vm1027, %v1345, %v1341
    %v1347 = vlaneseq
    %v1348 = vshrl.u32 %v1347, 7
    %v1349 = vsub.s32 %v1029, %v1348
    %v1350 = vrot.slane %v699, %v1349
    %v1351 = vsel %vm1034, %v1350, %v1346
    %v1352 = vlaneseq
    %v1353 = vshrl.u32 %v1352, 7
    %v1354 = vsub.s32 %v69, %v1353
    %v1355 = vrot.slane %v701, %v1354
    %v1356 = vlaneseq
    %v1357 = vshrl.u32 %v1356, 7
    %v1358 = vsub.s32 %v931, %v1357
    %v1359 = vrot.slane %v703, %v1358
    %v1360 = vsel %vm936, %v1359, %v1355
    %v1361 = vlaneseq
    %v1362 = vshrl.u32 %v1361, 7
    %v1363 = vsub.s32 %v938, %v1362
    %v1364 = vrot.slane %v705, %v1363
    %v1365 = vsel %vm943, %v1364, %v1360
    %v1366 = vlaneseq
    %v1367 = vshrl.u32 %v1366, 7
    %v1368 = vsub.s32 %v945, %v1367
    %v1369 = vrot.slane %v707, %v1368
    %v1370 = vsel %vm950, %v1369, %v1365
    %v1371 = vlaneseq
    %v1372 = vshrl.u32 %v1371, 7
    %v1373 = vsub.s32 %v952, %v1372
    %v1374 = vrot.slane %v709, %v1373
    %v1375 = vsel %vm957, %v1374, %v1370
    %v1376 = vlaneseq
    %v1377 = vshrl.u32 %v1376, 7
    %v1378 = vsub.s32 %v959, %v1377
    %v1379 = vrot.slane %v711, %v1378
    %v1380 = vsel %vm964, %v1379, %v1375
    %v1381 = vlaneseq
    %v1382 = vshrl.u32 %v1381, 7
    %v1383 = vsub.s32 %v966, %v1382
    %v1384 = vrot.slane %v713, %v1383
    %v1385 = vsel %vm971, %v1384, %v1380
    %v1386 = vlaneseq
    %v1387 = vshrl.u32 %v1386, 7
    %v1388 = vsub.s32 %v973, %v1387
    %v1389 = vrot.slane %v715, %v1388
    %v1390 = vsel %vm978, %v1389, %v1385
    %v1391 = vlaneseq
    %v1392 = vshrl.u32 %v1391, 7
    %v1393 = vsub.s32 %v980, %v1392
    %v1394 = vrot.slane %v717, %v1393
    %v1395 = vsel %vm985, %v1394, %v1390
    %v1396 = vlaneseq
    %v1397 = vshrl.u32 %v1396, 7
    %v1398 = vsub.s32 %v987, %v1397
    %v1399 = vrot.slane %v719, %v1398
    %v1400 = vsel %vm992, %v1399, %v1395
    %v1401 = vlaneseq
    %v1402 = vshrl.u32 %v1401, 7
    %v1403 = vsub.s32 %v994, %v1402
    %v1404 = vrot.slane %v721, %v1403
    %v1405 = vsel %vm999, %v1404, %v1400
    %v1406 = vlaneseq
    %v1407 = vshrl.u32 %v1406, 7
    %v1408 = vsub.s32 %v1001, %v1407
    %v1409 = vrot.slane %v723, %v1408
    %v1410 = vsel %vm1006, %v1409, %v1405
    %v1411 = vlaneseq
    %v1412 = vshrl.u32 %v1411, 7
    %v1413 = vsub.s32 %v1008, %v1412
    %v1414 = vrot.slane %v725, %v1413
    %v1415 = vsel %vm1013, %v1414, %v1410
    %v1416 = vlaneseq
    %v1417 = vshrl.u32 %v1416, 7
    %v1418 = vsub.s32 %v1015, %v1417
    %v1419 = vrot.slane %v727, %v1418
    %v1420 = vsel %vm1020, %v1419, %v1415
    %v1421 = vlaneseq
    %v1422 = vshrl.u32 %v1421, 7
    %v1423 = vsub.s32 %v1022, %v1422
    %v1424 = vrot.slane %v729, %v1423
    %v1425 = vsel %vm1027, %v1424, %v1420
    %v1426 = vlaneseq
    %v1427 = vshrl.u32 %v1426, 7
    %v1428 = vsub.s32 %v1029, %v1427
    %v1429 = vrot.slane %v731, %v1428
    %v1430 = vsel %vm1034, %v1429, %v1425
    %v1431 = vlaneseq
    %v1432 = vshrl.u32 %v1431, 7
    %v1433 = vsub.s32 %v69, %v1432
    %v1434 = vrot.slane %v733, %v1433
    %v1435 = vlaneseq
    %v1436 = vshrl.u32 %v1435, 7
    %v1437 = vsub.s32 %v931, %v1436
    %v1438 = vrot.slane %v735, %v1437
    %v1439 = vsel %vm936, %v1438, %v1434
    %v1440 = vlaneseq
    %v1441 = vshrl.u32 %v1440, 7
    %v1442 = vsub.s32 %v938, %v1441
    %v1443 = vrot.slane %v737, %v1442
    %v1444 = vsel %vm943, %v1443, %v1439
    %v1445 = vlaneseq
    %v1446 = vshrl.u32 %v1445, 7
    %v1447 = vsub.s32 %v945, %v1446
    %v1448 = vrot.slane %v739, %v1447
    %v1449 = vsel %vm950, %v1448, %v1444
    %v1450 = vlaneseq
    %v1451 = vshrl.u32 %v1450, 7
    %v1452 = vsub.s32 %v952, %v1451
    %v1453 = vrot.slane %v741, %v1452
    %v1454 = vsel %vm957, %v1453, %v1449
    %v1455 = vlaneseq
    %v1456 = vshrl.u32 %v1455, 7
    %v1457 = vsub.s32 %v959, %v1456
    %v1458 = vrot.slane %v743, %v1457
    %v1459 = vsel %vm964, %v1458, %v1454
    %v1460 = vlaneseq
    %v1461 = vshrl.u32 %v1460, 7
    %v1462 = vsub.s32 %v966, %v1461
    %v1463 = vrot.slane %v745, %v1462
    %v1464 = vsel %vm971, %v1463, %v1459
    %v1465 = vlaneseq
    %v1466 = vshrl.u32 %v1465, 7
    %v1467 = vsub.s32 %v973, %v1466
    %v1468 = vrot.slane %v747, %v1467
    %v1469 = vsel %vm978, %v1468, %v1464
    %v1470 = vlaneseq
    %v1471 = vshrl.u32 %v1470, 7
    %v1472 = vsub.s32 %v980, %v1471
    %v1473 = vrot.slane %v749, %v1472
    %v1474 = vsel %vm985, %v1473, %v1469
    %v1475 = vlaneseq
    %v1476 = vshrl.u32 %v1475, 7
    %v1477 = vsub.s32 %v987, %v1476
    %v1478 = vrot.slane %v751, %v1477
    %v1479 = vsel %vm992, %v1478, %v1474
    %v1480 = vlaneseq
    %v1481 = vshrl.u32 %v1480, 7
    %v1482 = vsub.s32 %v994, %v1481
    %v1483 = vrot.slane %v753, %v1482
    %v1484 = vsel %vm999, %v1483, %v1479
    %v1485 = vlaneseq
    %v1486 = vshrl.u32 %v1485, 7
    %v1487 = vsub.s32 %v1001, %v1486
    %v1488 = vrot.slane %v755, %v1487
    %v1489 = vsel %vm1006, %v1488, %v1484
    %v1490 = vlaneseq
    %v1491 = vshrl.u32 %v1490, 7
    %v1492 = vsub.s32 %v1008, %v1491
    %v1493 = vrot.slane %v757, %v1492
    %v1494 = vsel %vm1013, %v1493, %v1489
    %v1495 = vlaneseq
    %v1496 = vshrl.u32 %v1495, 7
    %v1497 = vsub.s32 %v1015, %v1496
    %v1498 = vrot.slane %v759, %v1497
    %v1499 = vsel %vm1020, %v1498, %v1494
    %v1500 = vlaneseq
    %v1501 = vshrl.u32 %v1500, 7
    %v1502 = vsub.s32 %v1022, %v1501
    %v1503 = vrot.slane %v761, %v1502
    %v1504 = vsel %vm1027, %v1503, %v1499
    %v1505 = vlaneseq
    %v1506 = vshrl.u32 %v1505, 7
    %v1507 = vsub.s32 %v1029, %v1506
    %v1508 = vrot.slane %v763, %v1507
    %v1509 = vsel %vm1034, %v1508, %v1504
    %v1510 = vlaneseq
    %v1511 = vshrl.u32 %v1510, 7
    %v1512 = vsub.s32 %v69, %v1511
    %v1513 = vrot.slane %v765, %v1512
    %v1514 = vlaneseq
    %v1515 = vshrl.u32 %v1514, 7
    %v1516 = vsub.s32 %v931, %v1515
    %v1517 = vrot.slane %v767, %v1516
    %v1518 = vsel %vm936, %v1517, %v1513
    %v1519 = vlaneseq
    %v1520 = vshrl.u32 %v1519, 7
    %v1521 = vsub.s32 %v938, %v1520
    %v1522 = vrot.slane %v769, %v1521
    %v1523 = vsel %vm943, %v1522, %v1518
    %v1524 = vlaneseq
    %v1525 = vshrl.u32 %v1524, 7
    %v1526 = vsub.s32 %v945, %v1525
    %v1527 = vrot.slane %v771, %v1526
    %v1528 = vsel %vm950, %v1527, %v1523
    %v1529 = vlaneseq
    %v1530 = vshrl.u32 %v1529, 7
    %v1531 = vsub.s32 %v952, %v1530
    %v1532 = vrot.slane %v773, %v1531
    %v1533 = vsel %vm957, %v1532, %v1528
    %v1534 = vlaneseq
    %v1535 = vshrl.u32 %v1534, 7
    %v1536 = vsub.s32 %v959, %v1535
    %v1537 = vrot.slane %v775, %v1536
    %v1538 = vsel %vm964, %v1537, %v1533
    %v1539 = vlaneseq
    %v1540 = vshrl.u32 %v1539, 7
    %v1541 = vsub.s32 %v966, %v1540
    %v1542 = vrot.slane %v777, %v1541
    %v1543 = vsel %vm971, %v1542, %v1538
    %v1544 = vlaneseq
    %v1545 = vshrl.u32 %v1544, 7
    %v1546 = vsub.s32 %v973, %v1545
    %v1547 = vrot.slane %v779, %v1546
    %v1548 = vsel %vm978, %v1547, %v1543
    %v1549 = vlaneseq
    %v1550 = vshrl.u32 %v1549, 7
    %v1551 = vsub.s32 %v980, %v1550
    %v1552 = vrot.slane %v781, %v1551
    %v1553 = vsel %vm985, %v1552, %v1548
    %v1554 = vlaneseq
    %v1555 = vshrl.u32 %v1554, 7
    %v1556 = vsub.s32 %v987, %v1555
    %v1557 = vrot.slane %v783, %v1556
    %v1558 = vsel %vm992, %v1557, %v1553
    %v1559 = vlaneseq
    %v1560 = vshrl.u32 %v1559, 7
    %v1561 = vsub.s32 %v994, %v1560
    %v1562 = vrot.slane %v785, %v1561
    %v1563 = vsel %vm999, %v1562, %v1558
    %v1564 = vlaneseq
    %v1565 = vshrl.u32 %v1564, 7
    %v1566 = vsub.s32 %v1001, %v1565
    %v1567 = vrot.slane %v787, %v1566
    %v1568 = vsel %vm1006, %v1567, %v1563
    %v1569 = vlaneseq
    %v1570 = vshrl.u32 %v1569, 7
    %v1571 = vsub.s32 %v1008, %v1570
    %v1572 = vrot.slane %v789, %v1571
    %v1573 = vsel %vm1013, %v1572, %v1568
    %v1574 = vlaneseq
    %v1575 = vshrl.u32 %v1574, 7
    %v1576 = vsub.s32 %v1015, %v1575
    %v1577 = vrot.slane %v791, %v1576
    %v1578 = vsel %vm1020, %v1577, %v1573
    %v1579 = vlaneseq
    %v1580 = vshrl.u32 %v1579, 7
    %v1581 = vsub.s32 %v1022, %v1580
    %v1582 = vrot.slane %v793, %v1581
    %v1583 = vsel %vm1027, %v1582, %v1578
    %v1584 = vlaneseq
    %v1585 = vshrl.u32 %v1584, 7
    %v1586 = vsub.s32 %v1029, %v1585
    %v1587 = vrot.slane %v795, %v1586
    %v1588 = vsel %vm1034, %v1587, %v1583
    %vm1589 = vcmask 1041409
    %v1590 = vsel %vm1589, %v1114, %v1035
    %vm1591 = vcmask 1042434
    %v1592 = vsel %vm1591, %v1193, %v1590
    %vm1593 = vcmask 1043459
    %v1594 = vsel %vm1593, %v1272, %v1592
    %vm1595 = vcmask 1044484
    %v1596 = vsel %vm1595, %v1351, %v1594
    %vm1597 = vcmask 1045509
    %v1598 = vsel %vm1597, %v1430, %v1596
    %vm1599 = vcmask 1046534
    %v1600 = vsel %vm1599, %v1509, %v1598
    %vm1601 = vcmask 1047559
    %v1602 = vsel %vm1601, %v1588, %v1600
    %v1604 = vsel %vm798, %v1602, 0.0
    %v1605 = vrsqrt.pop %v1604
    %v1606 = vmul.f32 %v1604, %v1605
    %vm1607 = vcmp.eq.f32.partialorder %v1604, inf
    %v1608 = vsel %vm1607, %v1604, %v1606
    %vm1609 = vcmp.eq.f32.partialorder %v1604, 0.0
    %v1610 = vand.u32 %v1604, 2147483648
    %v1611 = vsel %vm1609, %v1610, %v1608
    %v1612 = vlaneseq
    %v1613 = vshrl.u32 %v1612, 7
    %v1614 = vsub.s32 0, %v1613
    %v1615 = vrot.slane %v43, %v1614
    %vm1616 = vcmp.eq.s32.totalorder %v216, %v1615
    %v1617 = vsel %vm1616, 1.0, -1.0
    %v1618 = vsub.f32 1.0, %v1611
    %v1619 = vmul.f32 %v1618, %v1617
    %v1620 = vsub.f32 10.0, %v1619
    %v1621 = vmin.f32 %v1620, 10.0
    %v1622 = vmul.f32 %v1621, 1.442695
    %v1623 = vpow.pop %v1622
    %v1624 = vadd.f32 %v1623, 1.0
    %v1625 = vlog2.pop %v1624
    %v1626 = vmul.f32 %v1625, 0.6931472
    %vm1627 = vcmp.gt.f32.partialorder %v1620, 10.0
    %v1628 = vsel %vm1627, %v1620, %v1626
    %v1629 = vmul.f32 %v1628, %v72
    %1630 = vadd.xlane.f32.xlu0 %v1629
    %v1631 = vpop.xlane.xlu0 %1630
    %v1632 = vmul.f32 %v1631, 0.1
    %v1633 = vadd.f32 %v241, %v1632
    %v1634 = vmul.f32 %v1633, %v67
    %v1635 = vrot.slane %v1634, 4
    %v1636 = vadd.f32 %v1634, %v1635
    %v1637 = vrot.slane %v1636, 2
    %v1638 = vadd.f32 %v1636, %v1637
    %v1639 = vrot.slane %v1638, 1
    %v1640 = vadd.f32 %v1638, %v1639
    %vm1641 = vcmask 0
    %1642 = vst.msk [vmem:[#allocation2] sm:$0x1] %vm1641, %v1640
    // Predicated region
    $region26: #{tpu_custom_call.1} parent=1 // pred_check
      _
    $region27: #{tpu_custom_call.1} parent=1 // pred_check_branch
      %1644 = sbr.rel (0) target = $region29
    $region28: #{tpu_custom_call.1} parent=1 // pred_region
      %s1646 = ssub.s32 16, 16
      %1647 = vsyncadd [#allocation3], %s1646
      %s1649 = sshll.u32 [#allocation2], 4
      %s1650 = int_to_ptr.vmem [resolvable:$true] %s1649
      %1652 = dma.vmem_to_hbm [thread:$0]  %s1650, 16, %s6, [#allocation3]
    $region29: #{tpu_custom_call.1} parent=1 // pred_fallthru
      _
    // Predicated region
    $region30: #{tpu_custom_call.1} parent=1 // pred_check
      _
    $region31: #{tpu_custom_call.1} parent=1 // pred_check_branch
      %1654 = sbr.rel (0) target = $region33
    $region32: #{tpu_custom_call.1} parent=1 // pred_region
      %1655 = dma.done [#allocation3], 16
    $region33: #{tpu_custom_call.1} parent=1 // pred_fallthru
      _
    %1656 = vsyncpa [#allocation3], 1

</llo_original>
